<compile_context>
chip_gen: v7x
topology: tpu7x:2x2x1
jax: 0.10.0
libtpu: 0.0.40
codegen_flags: <defaults>
</compile_context>

<pallas_src>
import functools

import jax
import jax.numpy as jnp
from jax.experimental import pallas as pl
from jax.experimental.pallas import tpu as pltpu

H1, H2, H3 = 512, 512, 256
_EPS = 1e-5
_KPAD = 32   # pad concat(state, action) feature dim to a multiple of this


def _round_up(a, m):
    return ((a + m - 1) // m) * m


# --------------------------- shared layer math ----------------------------

def _ln_relu(x, gamma, beta, affine_bf16):
    """Single-pass LayerNorm (biased variance, matches nn.LayerNorm) + ReLU.

    Stats (sum, sum-of-squares, mean, rstd) are always f32; with
    affine_bf16=True the affine + ReLU run in bf16 (2 elems/lane on v6e/v7x)
    and the result feeds the next bf16 matmul directly.  Returns bf16.
    """
    inv_n = 1.0 / x.shape[-1]
    s1 = jnp.sum(x, axis=-1, keepdims=True)
    s2 = jnp.sum(x * x, axis=-1, keepdims=True)
    mean = s1 * inv_n
    var = jnp.maximum(s2 * inv_n - mean * mean, 0.0)   # clamp f32 cancellation
    rstd = jax.lax.rsqrt(var + _EPS)                   # EUP
    if affine_bf16:
        y = ((x.astype(jnp.bfloat16) - mean.astype(jnp.bfloat16))
             * rstd.astype(jnp.bfloat16) * gamma.astype(jnp.bfloat16)
             + beta.astype(jnp.bfloat16))
        return jnp.maximum(y, 0.0)
    y = (x - mean) * rstd * gamma + beta
    return jnp.maximum(y, 0.0).astype(jnp.bfloat16)


# ----------------------------- Pallas kernel ------------------------------

def _critic_kernel(x_ref, w1_ref, w2_ref, w3_ref, p512_ref, p256_ref, out_ref,
                   *, n_chunks, affine_bf16):
    # p512 rows: 0=b1 1=g1 2=be1 3=b2 4=g2 5=be2      (f32, [6, 512])
    # p256 rows: 0=b3 1=g3 2=be3 3=w4_row 4=b4(bcast) (f32, [5, 256])
    tb = x_ref.shape[0]
    tc = tb // n_chunks

    w1 = w1_ref[...]
    w2 = w2_ref[...]
    w3 = w3_ref[...]
    b1, g1, be1 = p512_ref[0:1, :], p512_ref[1:2, :], p512_ref[2:3, :]
    b2, g2, be2 = p512_ref[3:4, :], p512_ref[4:5, :], p512_ref[5:6, :]
    b3, g3, be3 = p256_ref[0:1, :], p256_ref[1:2, :], p256_ref[2:3, :]
    w4 = p256_ref[3:4, :]
    b4 = p256_ref[4:5, 0:1]

    # Independent half-tile chains in one basic block: lets the LLO scheduler
    # overlap one chunk's LayerNorm epilogue with the other chunk's matmuls.
    for c in range(n_chunks):
        rows = pl.ds(c * tc, tc)                       # static slice
        x = x_ref[rows, :]

        # input_layer (fused, padded K) -> norm1 -> relu
        h = jnp.dot(x, w1, preferred_element_type=jnp.float32) + b1
        h = _ln_relu(h, g1, be1, affine_bf16)

        # hidden_layer1 -> norm2 -> relu
        h = jnp.dot(h, w2, preferred_element_type=jnp.float32) + b2
        h = _ln_relu(h, g2, be2, affine_bf16)

        # hidden_layer2 -> norm3 -> relu
        h = jnp.dot(h, w3, preferred_element_type=jnp.float32) + b3
        h = _ln_relu(h, g3, be3, affine_bf16)

        # output_layer (256 -> 1): VPU multiply + lane-axis reduce, no N=1 MXU op
        q = jnp.sum(h.astype(jnp.float32) * w4, axis=-1, keepdims=True) + b4
        out_ref[rows, :] = q.astype(out_ref.dtype)


# ------------------------------ JAX wrapper -------------------------------

def critic_forward(state, action, params, *, tb_max=1024, affine_bf16=True):
    """state: [B, S], action: [B, A] -> q_value: [B, 1] (float32)."""
    B, S = state.shape
    A = action.shape[1]
    w1 = params["w1"]
    k_pad = w1.shape[0]

    # Fused input layer: one concatenated, zero-padded bf16 operand.
    x = jnp.concatenate([state, action], axis=1).astype(jnp.bfloat16)
    if k_pad != S + A:
        x = jnp.pad(x, ((0, 0), (0, k_pad - (S + A))))

    # Batch tiling: single block for small B; otherwise multiple-of-256 tiles
    # with >=2 grid steps so v7x can shard the batch across both TensorCores.
    if B <= 256:
        tb = B
    else:
        tb = min(tb_max, _round_up(pl.cdiv(B, 2), 256))
    bp = _round_up(B, tb)
    if bp != B:
        x = jnp.pad(x, ((0, bp - B), (0, 0)))
    grid = (bp // tb,)
    n_chunks = 2 if (tb >= 256 and tb % 256 == 0) else 1

    w2, w3 = params["w2"], params["w3"]
    p512, p256 = params["p512"], params["p256"]
    operands = (x, w1, w2, w3, p512, p256)

    def const_spec(shape):
        # constant block index -> weights DMA'd once, not re-streamed per tile
        return pl.BlockSpec(shape, lambda i: (0, 0))

    in_specs = [
        pl.BlockSpec((tb, k_pad), lambda i: (i, 0)),
        const_spec(w1.shape),
        const_spec(w2.shape),
        const_spec(w3.shape),
        const_spec(p512.shape),
        const_spec(p256.shape),
    ]
    out_specs = pl.BlockSpec((tb, 1), lambda i: (i, 0))

    flops = 2 * bp * (k_pad * H1 + H1 * H2 + H2 * H3 + H3)
    bytes_accessed = sum(int(o.size) * o.dtype.itemsize for o in operands) + bp * 4
    cost = pl.CostEstimate(flops=flops, transcendentals=3 * bp,
                           bytes_accessed=bytes_accessed)

    kernel = functools.partial(_critic_kernel, n_chunks=n_chunks,
                               affine_bf16=affine_bf16)

    q = pl.pallas_call(
        kernel,
        out_shape=jax.ShapeDtypeStruct((bp, 1), jnp.float32),
        grid=grid,
        in_specs=in_specs,
        out_specs=out_specs,
        compiler_params=pltpu.CompilerParams(
            dimension_semantics=("parallel",),        # v7x: shard batch over 2 TCs
            vmem_limit_bytes=32 * 1024 * 1024),
        cost_estimate=cost,
    )(*operands)
    return q[:B]


# --------------------------- Parameter creation ---------------------------

def _xavier_uniform(key, fan_in, fan_out):
    bound = (6.0 / (fan_in + fan_out)) ** 0.5
    return jax.random.uniform(key, (fan_in, fan_out), jnp.float32, -bound, bound)


def init_critic_params(key, state_dim, action_dim):
    d_in = state_dim + action_dim
    k_pad = _round_up(d_in, _KPAD)
    k1, k2, k3, k4 = jax.random.split(key, 4)
    w1 = _xavier_uniform(k1, d_in, H1)
    w2 = _xavier_uniform(k2, H1, H2)
    w3 = _xavier_uniform(k3, H2, H3)
    w4 = _xavier_uniform(k4, H3, 1)

    # Zero-padded, packed input-layer weight (state rows then action rows).
    w1p = jnp.zeros((k_pad, H1), jnp.float32).at[:d_in].set(w1)

    z512 = jnp.zeros((H1,), jnp.float32)
    o512 = jnp.ones((H1,), jnp.float32)
    z256 = jnp.zeros((H3,), jnp.float32)
    o256 = jnp.ones((H3,), jnp.float32)

    # Packed parameter slabs (f32): biases / LayerNorm gamma,beta (+ w4 row, b4)
    p512 = jnp.stack([z512, o512, z512,                 # b1, g1, be1
                      z512, o512, z512])                # b2, g2, be2
    p256 = jnp.stack([z256, o256, z256,                 # b3, g3, be3
                      w4[:, 0],                         # w4 as a [256] row
                      jnp.zeros((H3,), jnp.float32)])   # b4 (zeros_) broadcast row

    return {
        "w1": w1p.astype(jnp.bfloat16),
        "w2": w2.astype(jnp.bfloat16),
        "w3": w3.astype(jnp.bfloat16),
        "p512": p512,
        "p256": p256,
    }


# Pure-JAX reference mirroring the kernel's numerics (same dtypes / packing).
def critic_ref(state, action, params, *, affine_bf16=True):
    w1, w2, w3 = params["w1"], params["w2"], params["w3"]
    p512, p256 = params["p512"], params["p256"]
    k_pad = w1.shape[0]
    d_in = state.shape[1] + action.shape[1]

    x = jnp.concatenate([state, action], axis=1).astype(jnp.bfloat16)
    x = jnp.pad(x, ((0, 0), (0, k_pad - d_in)))

    h = jnp.dot(x, w1, preferred_element_type=jnp.float32) + p512[0:1]
    h = _ln_relu(h, p512[1:2], p512[2:3], affine_bf16)
    h = jnp.dot(h, w2, preferred_element_type=jnp.float32) + p512[3:4]
    h = _ln_relu(h, p512[4:5], p512[5:6], affine_bf16)
    h = jnp.dot(h, w3, preferred_element_type=jnp.float32) + p256[0:1]
    h = _ln_relu(h, p256[1:2], p256[2:3], affine_bf16)
    return (jnp.sum(h.astype(jnp.float32) * p256[3:4], axis=-1, keepdims=True)
            + p256[4, 0])


# --------------------------------- main -----------------------------------

if __name__ == "__main__":
    key = jax.random.PRNGKey(0)
    k_params, k_state, k_action = jax.random.split(key, 3)

    batch = 2
    state_dim = 16
    action_dim = 4

    params = init_critic_params(k_params, state_dim, action_dim)
    state = jax.random.normal(k_state, (batch, state_dim), jnp.float32)
    action = jax.random.normal(k_action, (batch, action_dim), jnp.float32)

    q = jax.block_until_ready(critic_forward(state, action, params))
    q_ref = jax.block_until_ready(critic_ref(state, action, params))

    assert q.shape == (batch, 1)
    # bf16 weights/epilogue => allow ~1e-2-level differences vs. the XLA ref.
    assert jnp.allclose(q, q_ref, atol=3e-2, rtol=3e-2), (q, q_ref)

    print("KERNEL_OK")
</pallas_src>

<mosaic_0001>
module attributes {stable_mosaic.version = 11 : i64} {
  func.func @_critic_kernel(%arg0: i32, %arg1: memref<2x32xbf16, #tpu.memory_space<vmem>>, %arg2: memref<32x512xbf16, #tpu.memory_space<vmem>>, %arg3: memref<512x512xbf16, #tpu.memory_space<vmem>>, %arg4: memref<512x256xbf16, #tpu.memory_space<vmem>>, %arg5: memref<6x512xf32, #tpu.memory_space<vmem>>, %arg6: memref<5x256xf32, #tpu.memory_space<vmem>>, %arg7: memref<2x1xf32, #tpu.memory_space<vmem>>) attributes {dimension_semantics = [#tpu.dimension_semantics<parallel>], iteration_bounds = array<i64: 1>, scalar_prefetch = 0 : i64, scratch_operands = 0 : i64, tpu.core_type = #tpu.core_type<tc>, window_params = [{transform_indices = @transform_0, window_bounds = array<i64: 2, 32>}, {pipeline_mode = #tpu.pipeline_mode<synchronous>, transform_indices = @transform_1, window_bounds = array<i64: 32, 512>}, {pipeline_mode = #tpu.pipeline_mode<synchronous>, transform_indices = @transform_2, window_bounds = array<i64: 512, 512>}, {pipeline_mode = #tpu.pipeline_mode<synchronous>, transform_indices = @transform_3, window_bounds = array<i64: 512, 256>}, {pipeline_mode = #tpu.pipeline_mode<synchronous>, transform_indices = @transform_4, window_bounds = array<i64: 6, 512>}, {pipeline_mode = #tpu.pipeline_mode<synchronous>, transform_indices = @transform_5, window_bounds = array<i64: 5, 256>}, {transform_indices = @transform_6, window_bounds = array<i64: 2, 1>}]} {
    %c0 = arith.constant 0 : index
    %c0_0 = arith.constant 0 : index
    %0 = vector.load %arg2[%c0, %c0_0] : memref<32x512xbf16, #tpu.memory_space<vmem>>, vector<32x512xbf16>
    %c0_1 = arith.constant 0 : index
    %c0_2 = arith.constant 0 : index
    %1 = vector.load %arg3[%c0_1, %c0_2] : memref<512x512xbf16, #tpu.memory_space<vmem>>, vector<512x512xbf16>
    %c0_3 = arith.constant 0 : index
    %c0_4 = arith.constant 0 : index
    %2 = vector.load %arg4[%c0_3, %c0_4] : memref<512x256xbf16, #tpu.memory_space<vmem>>, vector<512x256xbf16>
    %c0_5 = arith.constant 0 : index
    %c0_6 = arith.constant 0 : index
    %3 = vector.load %arg5[%c0_5, %c0_6] : memref<6x512xf32, #tpu.memory_space<vmem>>, vector<1x512xf32>
    %c1 = arith.constant 1 : index
    %c0_7 = arith.constant 0 : index
    %4 = vector.load %arg5[%c1, %c0_7] : memref<6x512xf32, #tpu.memory_space<vmem>>, vector<1x512xf32>
    %c2 = arith.constant 2 : index
    %c0_8 = arith.constant 0 : index
    %5 = vector.load %arg5[%c2, %c0_8] : memref<6x512xf32, #tpu.memory_space<vmem>>, vector<1x512xf32>
    %c3 = arith.constant 3 : index
    %c0_9 = arith.constant 0 : index
    %6 = vector.load %arg5[%c3, %c0_9] : memref<6x512xf32, #tpu.memory_space<vmem>>, vector<1x512xf32>
    %c4 = arith.constant 4 : index
    %c0_10 = arith.constant 0 : index
    %7 = vector.load %arg5[%c4, %c0_10] : memref<6x512xf32, #tpu.memory_space<vmem>>, vector<1x512xf32>
    %c5 = arith.constant 5 : index
    %c0_11 = arith.constant 0 : index
    %8 = vector.load %arg5[%c5, %c0_11] : memref<6x512xf32, #tpu.memory_space<vmem>>, vector<1x512xf32>
    %c0_12 = arith.constant 0 : index
    %c0_13 = arith.constant 0 : index
    %9 = vector.load %arg6[%c0_12, %c0_13] : memref<5x256xf32, #tpu.memory_space<vmem>>, vector<1x256xf32>
    %c1_14 = arith.constant 1 : index
    %c0_15 = arith.constant 0 : index
    %10 = vector.load %arg6[%c1_14, %c0_15] : memref<5x256xf32, #tpu.memory_space<vmem>>, vector<1x256xf32>
    %c2_16 = arith.constant 2 : index
    %c0_17 = arith.constant 0 : index
    %11 = vector.load %arg6[%c2_16, %c0_17] : memref<5x256xf32, #tpu.memory_space<vmem>>, vector<1x256xf32>
    %c3_18 = arith.constant 3 : index
    %c0_19 = arith.constant 0 : index
    %12 = vector.load %arg6[%c3_18, %c0_19] : memref<5x256xf32, #tpu.memory_space<vmem>>, vector<1x256xf32>
    %c4_20 = arith.constant 4 : index
    %c0_21 = arith.constant 0 : index
    %13 = vector.load %arg6[%c4_20, %c0_21] : memref<5x256xf32, #tpu.memory_space<vmem>>, vector<1x1xf32>
    %c0_22 = arith.constant 0 : index
    %c0_23 = arith.constant 0 : index
    %14 = vector.load %arg1[%c0_22, %c0_23] : memref<2x32xbf16, #tpu.memory_space<vmem>>, vector<2x32xbf16>
    %cst = arith.constant dense<0.000000e+00> : vector<2x512xf32>
    %15 = tpu.matmul %14, %0, %cst {dimension_numbers = #tpu.dot_dimension_numbers<[1], [0], [0], [1], [0, 0, 1, 1], [], []>} : vector<2x32xbf16>, vector<32x512xbf16>, vector<2x512xf32> -> vector<2x512xf32>
    %16 = vector.broadcast %3 : vector<1x512xf32> to vector<2x512xf32>
    %17 = arith.addf %15, %16 : vector<2x512xf32>
    %cst_24 = arith.constant dense<0.000000e+00> : vector<2xf32>
    %18 = vector.multi_reduction <add>, %17, %cst_24 [1] : vector<2x512xf32> to vector<2xf32>
    %19 = vector.shape_cast %18 : vector<2xf32> to vector<2x1xf32>
    %20 = arith.mulf %17, %17 : vector<2x512xf32>
    %cst_25 = arith.constant dense<0.000000e+00> : vector<2xf32>
    %21 = vector.multi_reduction <add>, %20, %cst_25 [1] : vector<2x512xf32> to vector<2xf32>
    %22 = vector.shape_cast %21 : vector<2xf32> to vector<2x1xf32>
    %cst_26 = arith.constant 0.001953125 : f32
    %23 = vector.broadcast %cst_26 : f32 to vector<2x1xf32>
    %24 = arith.mulf %19, %23 : vector<2x1xf32>
    %cst_27 = arith.constant 0.001953125 : f32
    %25 = vector.broadcast %cst_27 : f32 to vector<2x1xf32>
    %26 = arith.mulf %22, %25 : vector<2x1xf32>
    %27 = arith.mulf %24, %24 : vector<2x1xf32>
    %28 = arith.subf %26, %27 : vector<2x1xf32>
    %cst_28 = arith.constant 0.000000e+00 : f32
    %29 = vector.broadcast %cst_28 : f32 to vector<2x1xf32>
    %30 = arith.maximumf %28, %29 : vector<2x1xf32>
    %cst_29 = arith.constant 9.99999974E-6 : f32
    %31 = vector.broadcast %cst_29 : f32 to vector<2x1xf32>
    %32 = arith.addf %30, %31 : vector<2x1xf32>
    %33 = math.rsqrt %32 : vector<2x1xf32>
    %34 = arith.truncf %17 : vector<2x512xf32> to vector<2x512xbf16>
    %35 = arith.truncf %24 : vector<2x1xf32> to vector<2x1xbf16>
    %36 = vector.broadcast %35 : vector<2x1xbf16> to vector<2x512xbf16>
    %37 = arith.subf %34, %36 : vector<2x512xbf16>
    %38 = arith.truncf %33 : vector<2x1xf32> to vector<2x1xbf16>
    %39 = vector.broadcast %38 : vector<2x1xbf16> to vector<2x512xbf16>
    %40 = arith.mulf %37, %39 : vector<2x512xbf16>
    %41 = arith.truncf %4 : vector<1x512xf32> to vector<1x512xbf16>
    %42 = vector.broadcast %41 : vector<1x512xbf16> to vector<2x512xbf16>
    %43 = arith.mulf %40, %42 : vector<2x512xbf16>
    %44 = arith.truncf %5 : vector<1x512xf32> to vector<1x512xbf16>
    %45 = vector.broadcast %44 : vector<1x512xbf16> to vector<2x512xbf16>
    %46 = arith.addf %43, %45 : vector<2x512xbf16>
    %cst_30 = arith.constant 0.000000e+00 : bf16
    %47 = vector.broadcast %cst_30 : bf16 to vector<2x512xbf16>
    %48 = arith.maximumf %46, %47 : vector<2x512xbf16>
    %cst_31 = arith.constant dense<0.000000e+00> : vector<2x512xf32>
    %49 = tpu.matmul %48, %1, %cst_31 {dimension_numbers = #tpu.dot_dimension_numbers<[1], [0], [0], [1], [0, 0, 1, 1], [], []>} : vector<2x512xbf16>, vector<512x512xbf16>, vector<2x512xf32> -> vector<2x512xf32>
    %50 = vector.broadcast %6 : vector<1x512xf32> to vector<2x512xf32>
    %51 = arith.addf %49, %50 : vector<2x512xf32>
    %cst_32 = arith.constant dense<0.000000e+00> : vector<2xf32>
    %52 = vector.multi_reduction <add>, %51, %cst_32 [1] : vector<2x512xf32> to vector<2xf32>
    %53 = vector.shape_cast %52 : vector<2xf32> to vector<2x1xf32>
    %54 = arith.mulf %51, %51 : vector<2x512xf32>
    %cst_33 = arith.constant dense<0.000000e+00> : vector<2xf32>
    %55 = vector.multi_reduction <add>, %54, %cst_33 [1] : vector<2x512xf32> to vector<2xf32>
    %56 = vector.shape_cast %55 : vector<2xf32> to vector<2x1xf32>
    %cst_34 = arith.constant 0.001953125 : f32
    %57 = vector.broadcast %cst_34 : f32 to vector<2x1xf32>
    %58 = arith.mulf %53, %57 : vector<2x1xf32>
    %cst_35 = arith.constant 0.001953125 : f32
    %59 = vector.broadcast %cst_35 : f32 to vector<2x1xf32>
    %60 = arith.mulf %56, %59 : vector<2x1xf32>
    %61 = arith.mulf %58, %58 : vector<2x1xf32>
    %62 = arith.subf %60, %61 : vector<2x1xf32>
    %cst_36 = arith.constant 0.000000e+00 : f32
    %63 = vector.broadcast %cst_36 : f32 to vector<2x1xf32>
    %64 = arith.maximumf %62, %63 : vector<2x1xf32>
    %cst_37 = arith.constant 9.99999974E-6 : f32
    %65 = vector.broadcast %cst_37 : f32 to vector<2x1xf32>
    %66 = arith.addf %64, %65 : vector<2x1xf32>
    %67 = math.rsqrt %66 : vector<2x1xf32>
    %68 = arith.truncf %51 : vector<2x512xf32> to vector<2x512xbf16>
    %69 = arith.truncf %58 : vector<2x1xf32> to vector<2x1xbf16>
    %70 = vector.broadcast %69 : vector<2x1xbf16> to vector<2x512xbf16>
    %71 = arith.subf %68, %70 : vector<2x512xbf16>
    %72 = arith.truncf %67 : vector<2x1xf32> to vector<2x1xbf16>
    %73 = vector.broadcast %72 : vector<2x1xbf16> to vector<2x512xbf16>
    %74 = arith.mulf %71, %73 : vector<2x512xbf16>
    %75 = arith.truncf %7 : vector<1x512xf32> to vector<1x512xbf16>
    %76 = vector.broadcast %75 : vector<1x512xbf16> to vector<2x512xbf16>
    %77 = arith.mulf %74, %76 : vector<2x512xbf16>
    %78 = arith.truncf %8 : vector<1x512xf32> to vector<1x512xbf16>
    %79 = vector.broadcast %78 : vector<1x512xbf16> to vector<2x512xbf16>
    %80 = arith.addf %77, %79 : vector<2x512xbf16>
    %cst_38 = arith.constant 0.000000e+00 : bf16
    %81 = vector.broadcast %cst_38 : bf16 to vector<2x512xbf16>
    %82 = arith.maximumf %80, %81 : vector<2x512xbf16>
    %cst_39 = arith.constant dense<0.000000e+00> : vector<2x256xf32>
    %83 = tpu.matmul %82, %2, %cst_39 {dimension_numbers = #tpu.dot_dimension_numbers<[1], [0], [0], [1], [0, 0, 1, 1], [], []>} : vector<2x512xbf16>, vector<512x256xbf16>, vector<2x256xf32> -> vector<2x256xf32>
    %84 = vector.broadcast %9 : vector<1x256xf32> to vector<2x256xf32>
    %85 = arith.addf %83, %84 : vector<2x256xf32>
    %cst_40 = arith.constant dense<0.000000e+00> : vector<2xf32>
    %86 = vector.multi_reduction <add>, %85, %cst_40 [1] : vector<2x256xf32> to vector<2xf32>
    %87 = vector.shape_cast %86 : vector<2xf32> to vector<2x1xf32>
    %88 = arith.mulf %85, %85 : vector<2x256xf32>
    %cst_41 = arith.constant dense<0.000000e+00> : vector<2xf32>
    %89 = vector.multi_reduction <add>, %88, %cst_41 [1] : vector<2x256xf32> to vector<2xf32>
    %90 = vector.shape_cast %89 : vector<2xf32> to vector<2x1xf32>
    %cst_42 = arith.constant 3.906250e-03 : f32
    %91 = vector.broadcast %cst_42 : f32 to vector<2x1xf32>
    %92 = arith.mulf %87, %91 : vector<2x1xf32>
    %cst_43 = arith.constant 3.906250e-03 : f32
    %93 = vector.broadcast %cst_43 : f32 to vector<2x1xf32>
    %94 = arith.mulf %90, %93 : vector<2x1xf32>
    %95 = arith.mulf %92, %92 : vector<2x1xf32>
    %96 = arith.subf %94, %95 : vector<2x1xf32>
    %cst_44 = arith.constant 0.000000e+00 : f32
    %97 = vector.broadcast %cst_44 : f32 to vector<2x1xf32>
    %98 = arith.maximumf %96, %97 : vector<2x1xf32>
    %cst_45 = arith.constant 9.99999974E-6 : f32
    %99 = vector.broadcast %cst_45 : f32 to vector<2x1xf32>
    %100 = arith.addf %98, %99 : vector<2x1xf32>
    %101 = math.rsqrt %100 : vector<2x1xf32>
    %102 = arith.truncf %85 : vector<2x256xf32> to vector<2x256xbf16>
    %103 = arith.truncf %92 : vector<2x1xf32> to vector<2x1xbf16>
    %104 = vector.broadcast %103 : vector<2x1xbf16> to vector<2x256xbf16>
    %105 = arith.subf %102, %104 : vector<2x256xbf16>
    %106 = arith.truncf %101 : vector<2x1xf32> to vector<2x1xbf16>
    %107 = vector.broadcast %106 : vector<2x1xbf16> to vector<2x256xbf16>
    %108 = arith.mulf %105, %107 : vector<2x256xbf16>
    %109 = arith.truncf %10 : vector<1x256xf32> to vector<1x256xbf16>
    %110 = vector.broadcast %109 : vector<1x256xbf16> to vector<2x256xbf16>
    %111 = arith.mulf %108, %110 : vector<2x256xbf16>
    %112 = arith.truncf %11 : vector<1x256xf32> to vector<1x256xbf16>
    %113 = vector.broadcast %112 : vector<1x256xbf16> to vector<2x256xbf16>
    %114 = arith.addf %111, %113 : vector<2x256xbf16>
    %cst_46 = arith.constant 0.000000e+00 : bf16
    %115 = vector.broadcast %cst_46 : bf16 to vector<2x256xbf16>
    %116 = arith.maximumf %114, %115 : vector<2x256xbf16>
    %117 = arith.extf %116 : vector<2x256xbf16> to vector<2x256xf32>
    %118 = vector.broadcast %12 : vector<1x256xf32> to vector<2x256xf32>
    %119 = arith.mulf %117, %118 : vector<2x256xf32>
    %cst_47 = arith.constant dense<0.000000e+00> : vector<2xf32>
    %120 = vector.multi_reduction <add>, %119, %cst_47 [1] : vector<2x256xf32> to vector<2xf32>
    %121 = vector.shape_cast %120 : vector<2xf32> to vector<2x1xf32>
    %122 = vector.broadcast %13 : vector<1x1xf32> to vector<2x1xf32>
    %123 = arith.addf %121, %122 : vector<2x1xf32>
    %c0_48 = arith.constant 0 : index
    %c0_49 = arith.constant 0 : index
    %124 = vector.load %arg7[%c0_48, %c0_49] : memref<2x1xf32, #tpu.memory_space<vmem>>, vector<2x1xf32>
    tpu.vector_store %arg7[%c0_48, %c0_49], %123 {strides = array<i32>} : memref<2x1xf32, #tpu.memory_space<vmem>>, vector<2x1xf32>,
    return
  }
  func.func @transform_0(%arg0: i32) -> (i32, i32) {
    %c0_i32 = arith.constant 0 : i32
    %c0_i32_0 = arith.constant 0 : i32
    return %arg0, %c0_i32 : i32, i32
  }
  func.func @transform_1(%arg0: i32) -> (i32, i32) {
    %c0_i32 = arith.constant 0 : i32
    %c0_i32_0 = arith.constant 0 : i32
    %c0_i32_1 = arith.constant 0 : i32
    return %c0_i32, %c0_i32_0 : i32, i32
  }
  func.func @transform_2(%arg0: i32) -> (i32, i32) {
    %c0_i32 = arith.constant 0 : i32
    %c0_i32_0 = arith.constant 0 : i32
    %c0_i32_1 = arith.constant 0 : i32
    return %c0_i32, %c0_i32_0 : i32, i32
  }
  func.func @transform_3(%arg0: i32) -> (i32, i32) {
    %c0_i32 = arith.constant 0 : i32
    %c0_i32_0 = arith.constant 0 : i32
    %c0_i32_1 = arith.constant 0 : i32
    return %c0_i32, %c0_i32_0 : i32, i32
  }
  func.func @transform_4(%arg0: i32) -> (i32, i32) {
    %c0_i32 = arith.constant 0 : i32
    %c0_i32_0 = arith.constant 0 : i32
    %c0_i32_1 = arith.constant 0 : i32
    return %c0_i32, %c0_i32_0 : i32, i32
  }
  func.func @transform_5(%arg0: i32) -> (i32, i32) {
    %c0_i32 = arith.constant 0 : i32
    %c0_i32_0 = arith.constant 0 : i32
    %c0_i32_1 = arith.constant 0 : i32
    return %c0_i32, %c0_i32_0 : i32, i32
  }
  func.func @transform_6(%arg0: i32) -> (i32, i32) {
    %c0_i32 = arith.constant 0 : i32
    %c0_i32_0 = arith.constant 0 : i32
    return %arg0, %c0_i32 : i32, i32
  }
}

</mosaic_0001>

<llo_original>
// kernel: tpu_custom_call.1
$region0: #{tpu_custom_call.1}
  #allocation0 [shape = 'u32[]', space=smem, size = 0x4, offset = 0x4, fixed_abs, tag = 'smem constant byte address 0x4 - core index']
  #allocation1 [shape = 'u32[144,128]{1,0:T(1,128)}', space=vmem, size = 0x12000, scoped, tag = 'internal scratch']
  %s0 = inlined_call_operand.hbm [shape: bf16[2,32], index: 0, kind: input, shape index: {}]
  %s1 = inlined_call_operand.hbm [shape: bf16[32,512], index: 1, kind: input, shape index: {}]
  %s2 = inlined_call_operand.hbm [shape: bf16[512,512], index: 2, kind: input, shape index: {}]
  %s3 = inlined_call_operand.hbm [shape: bf16[512,256], index: 3, kind: input, shape index: {}]
  %s4 = inlined_call_operand.hbm [shape: f32[6,512], index: 4, kind: input, shape index: {}]
  %s5 = inlined_call_operand.vmem [shape: f32[5,256], index: 5, kind: input, shape index: {}]
  %s6 = inlined_call_operand.vmem [shape: f32[2,1], index: 6, kind: output, shape index: {}]
  %s7 = sld [smem:[#allocation0]]
  $region54: #{tpu_custom_call.1} parent=0
    _
  %s9 = ssub.s32 1, %s7
  %s10 = scalar_select 0, %s9, %s7
  $region1: #{tpu_custom_call.1} parent=0
    #allocation2 [shape = 'u8[512]{0}', space=vmem, size = 0x400, scoped, tag = 'input window, operand 0, single buffered']
    #allocation3 [shape = 's32[1]{0}', space=sflag, size = 0x4, scoped, tag = 'scoped memory for tpu_custom_call.1']
    #allocation4 [shape = 'u8[32768]{0}', space=vmem, size = 0x8000, scoped, tag = 'input window, operand 1, single buffered']
    #allocation5 [shape = 's32[1]{0}', space=sflag, size = 0x4, scoped, tag = 'scoped memory for tpu_custom_call.1']
    #allocation6 [shape = 'u8[524288]{0}', space=vmem, size = 0x80000, scoped, tag = 'input window, operand 2, single buffered']
    #allocation7 [shape = 'u8[262144]{0}', space=vmem, size = 0x40000, scoped, tag = 'input window, operand 3, single buffered']
    #allocation8 [shape = 's32[1]{0}', space=sflag, size = 0x4, scoped, tag = 'scoped memory for tpu_custom_call.1']
    #allocation9 [shape = 'u8[16384]{0}', space=vmem, size = 0x4000, scoped, tag = 'input window, operand 4, single buffered']
    %11 = vsyncpa [#allocation3], 0
    %12 = vsyncpa [#allocation5], 0
    %13 = vsyncpa [#allocation8], 0
    // Predicated region
    $region2: #{tpu_custom_call.1} parent=1 // pred_check
      _
    $region3: #{tpu_custom_call.1} parent=1 // pred_check_branch
      %15 = sbr.rel (0) target = $region5
    $region4: #{tpu_custom_call.1} parent=1 // pred_region
      %s17 = ssub.s32 16, 16
      %18 = vsyncadd [#allocation3], %s17
      %s20 = sshll.u32 [#allocation2], 4
      %s21 = int_to_ptr.vmem [resolvable:$true] %s20
      %23 = dma.hbm_to_vmem [thread:$0]  %s0, 16, %s21, [#allocation3]
    $region5: #{tpu_custom_call.1} parent=1 // pred_fallthru
      _
    // Predicated region
    $region6: #{tpu_custom_call.1} parent=1 // pred_check
      _
    $region7: #{tpu_custom_call.1} parent=1 // pred_check_branch
      %25 = sbr.rel (0) target = $region9
    $region8: #{tpu_custom_call.1} parent=1 // pred_region
      %s27 = ssub.s32 1024, 1024
      %28 = vsyncadd [#allocation5], %s27
      %s29 = sshll.u32 [#allocation4], 4
      %s30 = int_to_ptr.vmem [resolvable:$true] %s29
      %35 = dma.hbm_to_vmem [thread:$0]  %s1, 1024, %s30, [#allocation5], 256, 256, 16
    $region9: #{tpu_custom_call.1} parent=1 // pred_fallthru
      _
    // Predicated region
    $region10: #{tpu_custom_call.1} parent=1 // pred_check
      _
    $region11: #{tpu_custom_call.1} parent=1 // pred_check_branch
      %37 = sbr.rel (0) target = $region13
    $region12: #{tpu_custom_call.1} parent=1 // pred_region
      %s39 = ssub.s32 16384, 16384
      %40 = vsyncadd [#allocation5], %s39
      %s41 = sshll.u32 [#allocation6], 4
      %s42 = int_to_ptr.vmem [resolvable:$true] %s41
      %47 = dma.hbm_to_vmem [thread:$0]  %s2, 16384, %s42, [#allocation5], 256, 256, 16
    $region13: #{tpu_custom_call.1} parent=1 // pred_fallthru
      _
    // Predicated region
    $region14: #{tpu_custom_call.1} parent=1 // pred_check
      _
    $region15: #{tpu_custom_call.1} parent=1 // pred_check_branch
      %49 = sbr.rel (0) target = $region17
    $region16: #{tpu_custom_call.1} parent=1 // pred_region
      %s51 = ssub.s32 8192, 8192
      %52 = vsyncadd [#allocation8], %s51
      %s53 = sshll.u32 [#allocation7], 4
      %s54 = int_to_ptr.vmem [resolvable:$true] %s53
      %59 = dma.hbm_to_vmem [thread:$0]  %s3, 8192, %s54, [#allocation8], 128, 128, 8
    $region17: #{tpu_custom_call.1} parent=1 // pred_fallthru
      _
    // Predicated region
    $region18: #{tpu_custom_call.1} parent=1 // pred_check
      _
    $region19: #{tpu_custom_call.1} parent=1 // pred_check_branch
      %61 = sbr.rel (0) target = $region21
    $region20: #{tpu_custom_call.1} parent=1 // pred_region
      %s63 = ssub.s32 512, 512
      %64 = vsyncadd [#allocation8], %s63
      %s66 = sshll.u32 [#allocation9], 4
      %s67 = int_to_ptr.vmem [resolvable:$true] %s66
      %69 = dma.hbm_to_vmem [thread:$0]  %s4, 512, %s67, [#allocation8]
    $region21: #{tpu_custom_call.1} parent=1 // pred_fallthru
      _
    // Predicated region
    $region22: #{tpu_custom_call.1} parent=1 // pred_check
      _
    $region23: #{tpu_custom_call.1} parent=1 // pred_check_branch
      %71 = sbr.rel (0) target = $region25
    $region24: #{tpu_custom_call.1} parent=1 // pred_region
      _
    $region25: #{tpu_custom_call.1} parent=1 // pred_fallthru
      _
    // Predicated region
    $region26: #{tpu_custom_call.1} parent=1 // pred_check
      _
    $region27: #{tpu_custom_call.1} parent=1 // pred_check_branch
      %73 = sbr.rel (0) target = $region29
    $region28: #{tpu_custom_call.1} parent=1 // pred_region
      %74 = dma.done [#allocation3], 16
    $region29: #{tpu_custom_call.1} parent=1 // pred_fallthru
      _
    // Predicated region
    $region30: #{tpu_custom_call.1} parent=1 // pred_check
      _
    $region31: #{tpu_custom_call.1} parent=1 // pred_check_branch
      %76 = sbr.rel (0) target = $region33
    $region32: #{tpu_custom_call.1} parent=1 // pred_region
      %77 = dma.done [#allocation5], 1024
    $region33: #{tpu_custom_call.1} parent=1 // pred_fallthru
      _
    // Predicated region
    $region34: #{tpu_custom_call.1} parent=1 // pred_check
      _
    $region35: #{tpu_custom_call.1} parent=1 // pred_check_branch
      %79 = sbr.rel (0) target = $region37
    $region36: #{tpu_custom_call.1} parent=1 // pred_region
      %80 = dma.done [#allocation5], 16384
    $region37: #{tpu_custom_call.1} parent=1 // pred_fallthru
      _
    // Predicated region
    $region38: #{tpu_custom_call.1} parent=1 // pred_check
      _
    $region39: #{tpu_custom_call.1} parent=1 // pred_check_branch
      %82 = sbr.rel (0) target = $region41
    $region40: #{tpu_custom_call.1} parent=1 // pred_region
      %83 = dma.done [#allocation8], 8192
    $region41: #{tpu_custom_call.1} parent=1 // pred_fallthru
      _
    // Predicated region
    $region42: #{tpu_custom_call.1} parent=1 // pred_check
      _
    $region43: #{tpu_custom_call.1} parent=1 // pred_check_branch
      %85 = sbr.rel (0) target = $region45
    $region44: #{tpu_custom_call.1} parent=1 // pred_region
      %86 = dma.done [#allocation8], 512
    $region45: #{tpu_custom_call.1} parent=1 // pred_fallthru
      _
    %v88 = vld [vmem:[#allocation4] sm:$0xff]
    %v89 = vld [vmem:[#allocation4 + $0x8] sm:$0xff]
    %v90 = vld [vmem:[#allocation4 + $0x10] sm:$0xff]
    %v91 = vld [vmem:[#allocation4 + $0x18] sm:$0xff]
    %v92 = vld [vmem:[#allocation4 + $0x20] sm:$0xff]
    %v93 = vld [vmem:[#allocation4 + $0x28] sm:$0xff]
    %v94 = vld [vmem:[#allocation4 + $0x30] sm:$0xff]
    %v95 = vld [vmem:[#allocation4 + $0x38] sm:$0xff]
    %v96 = vld [vmem:[#allocation6] sm:$0xff]
    %v97 = vld [vmem:[#allocation6 + $0x8] sm:$0xff]
    %v98 = vld [vmem:[#allocation6 + $0x10] sm:$0xff]
    %v99 = vld [vmem:[#allocation6 + $0x18] sm:$0xff]
    %v100 = vld [vmem:[#allocation6 + $0x20] sm:$0xff]
    %v101 = vld [vmem:[#allocation6 + $0x28] sm:$0xff]
    %v102 = vld [vmem:[#allocation6 + $0x30] sm:$0xff]
    %v103 = vld [vmem:[#allocation6 + $0x38] sm:$0xff]
    %v104 = vld [vmem:[#allocation6 + $0x40] sm:$0xff]
    %v105 = vld [vmem:[#allocation6 + $0x48] sm:$0xff]
    %v106 = vld [vmem:[#allocation6 + $0x50] sm:$0xff]
    %v107 = vld [vmem:[#allocation6 + $0x58] sm:$0xff]
    %v108 = vld [vmem:[#allocation6 + $0x60] sm:$0xff]
    %v109 = vld [vmem:[#allocation6 + $0x68] sm:$0xff]
    %v110 = vld [vmem:[#allocation6 + $0x70] sm:$0xff]
    %v111 = vld [vmem:[#allocation6 + $0x78] sm:$0xff]
    %v112 = vld [vmem:[#allocation6 + $0x80] sm:$0xff]
    %v113 = vld [vmem:[#allocation6 + $0x88] sm:$0xff]
    %v114 = vld [vmem:[#allocation6 + $0x90] sm:$0xff]
    %v115 = vld [vmem:[#allocation6 + $0x98] sm:$0xff]
    %v116 = vld [vmem:[#allocation6 + $0xa0] sm:$0xff]
    %v117 = vld [vmem:[#allocation6 + $0xa8] sm:$0xff]
    %v118 = vld [vmem:[#allocation6 + $0xb0] sm:$0xff]
    %v119 = vld [vmem:[#allocation6 + $0xb8] sm:$0xff]
    %v120 = vld [vmem:[#allocation6 + $0xc0] sm:$0xff]
    %v121 = vld [vmem:[#allocation6 + $0xc8] sm:$0xff]
    %v122 = vld [vmem:[#allocation6 + $0xd0] sm:$0xff]
    %v123 = vld [vmem:[#allocation6 + $0xd8] sm:$0xff]
    %v124 = vld [vmem:[#allocation6 + $0xe0] sm:$0xff]
    %v125 = vld [vmem:[#allocation6 + $0xe8] sm:$0xff]
    %v126 = vld [vmem:[#allocation6 + $0xf0] sm:$0xff]
    %v127 = vld [vmem:[#allocation6 + $0xf8] sm:$0xff]
    %v128 = vld [vmem:[#allocation6 + $0x100] sm:$0xff]
    %v129 = vld [vmem:[#allocation6 + $0x108] sm:$0xff]
    %v130 = vld [vmem:[#allocation6 + $0x110] sm:$0xff]
    %v131 = vld [vmem:[#allocation6 + $0x118] sm:$0xff]
    %v132 = vld [vmem:[#allocation6 + $0x120] sm:$0xff]
    %v133 = vld [vmem:[#allocation6 + $0x128] sm:$0xff]
    %v134 = vld [vmem:[#allocation6 + $0x130] sm:$0xff]
    %v135 = vld [vmem:[#allocation6 + $0x138] sm:$0xff]
    %v136 = vld [vmem:[#allocation6 + $0x140] sm:$0xff]
    %v137 = vld [vmem:[#allocation6 + $0x148] sm:$0xff]
    %v138 = vld [vmem:[#allocation6 + $0x150] sm:$0xff]
    %v139 = vld [vmem:[#allocation6 + $0x158] sm:$0xff]
    %v140 = vld [vmem:[#allocation6 + $0x160] sm:$0xff]
    %v141 = vld [vmem:[#allocation6 + $0x168] sm:$0xff]
    %v142 = vld [vmem:[#allocation6 + $0x170] sm:$0xff]
    %v143 = vld [vmem:[#allocation6 + $0x178] sm:$0xff]
    %v144 = vld [vmem:[#allocation6 + $0x180] sm:$0xff]
    %v145 = vld [vmem:[#allocation6 + $0x188] sm:$0xff]
    %v146 = vld [vmem:[#allocation6 + $0x190] sm:$0xff]
    %v147 = vld [vmem:[#allocation6 + $0x198] sm:$0xff]
    %v148 = vld [vmem:[#allocation6 + $0x1a0] sm:$0xff]
    %v149 = vld [vmem:[#allocation6 + $0x1a8] sm:$0xff]
    %v150 = vld [vmem:[#allocation6 + $0x1b0] sm:$0xff]
    %v151 = vld [vmem:[#allocation6 + $0x1b8] sm:$0xff]
    %v152 = vld [vmem:[#allocation6 + $0x1c0] sm:$0xff]
    %v153 = vld [vmem:[#allocation6 + $0x1c8] sm:$0xff]
    %v154 = vld [vmem:[#allocation6 + $0x1d0] sm:$0xff]
    %v155 = vld [vmem:[#allocation6 + $0x1d8] sm:$0xff]
    %v156 = vld [vmem:[#allocation6 + $0x1e0] sm:$0xff]
    %v157 = vld [vmem:[#allocation6 + $0x1e8] sm:$0xff]
    %v158 = vld [vmem:[#allocation6 + $0x1f0] sm:$0xff]
    %v159 = vld [vmem:[#allocation6 + $0x1f8] sm:$0xff]
    %v160 = vld [vmem:[#allocation6 + $0x200] sm:$0xff]
    %v161 = vld [vmem:[#allocation6 + $0x208] sm:$0xff]
    %v162 = vld [vmem:[#allocation6 + $0x210] sm:$0xff]
    %v163 = vld [vmem:[#allocation6 + $0x218] sm:$0xff]
    %v164 = vld [vmem:[#allocation6 + $0x220] sm:$0xff]
    %v165 = vld [vmem:[#allocation6 + $0x228] sm:$0xff]
    %v166 = vld [vmem:[#allocation6 + $0x230] sm:$0xff]
    %v167 = vld [vmem:[#allocation6 + $0x238] sm:$0xff]
    %v168 = vld [vmem:[#allocation6 + $0x240] sm:$0xff]
    %v169 = vld [vmem:[#allocation6 + $0x248] sm:$0xff]
    %v170 = vld [vmem:[#allocation6 + $0x250] sm:$0xff]
    %v171 = vld [vmem:[#allocation6 + $0x258] sm:$0xff]
    %v172 = vld [vmem:[#allocation6 + $0x260] sm:$0xff]
    %v173 = vld [vmem:[#allocation6 + $0x268] sm:$0xff]
    %v174 = vld [vmem:[#allocation6 + $0x270] sm:$0xff]
    %v175 = vld [vmem:[#allocation6 + $0x278] sm:$0xff]
    %v176 = vld [vmem:[#allocation6 + $0x280] sm:$0xff]
    %v177 = vld [vmem:[#allocation6 + $0x288] sm:$0xff]
    %v178 = vld [vmem:[#allocation6 + $0x290] sm:$0xff]
    %v179 = vld [vmem:[#allocation6 + $0x298] sm:$0xff]
    %v180 = vld [vmem:[#allocation6 + $0x2a0] sm:$0xff]
    %v181 = vld [vmem:[#allocation6 + $0x2a8] sm:$0xff]
    %v182 = vld [vmem:[#allocation6 + $0x2b0] sm:$0xff]
    %v183 = vld [vmem:[#allocation6 + $0x2b8] sm:$0xff]
    %v184 = vld [vmem:[#allocation6 + $0x2c0] sm:$0xff]
    %v185 = vld [vmem:[#allocation6 + $0x2c8] sm:$0xff]
    %v186 = vld [vmem:[#allocation6 + $0x2d0] sm:$0xff]
    %v187 = vld [vmem:[#allocation6 + $0x2d8] sm:$0xff]
    %v188 = vld [vmem:[#allocation6 + $0x2e0] sm:$0xff]
    %v189 = vld [vmem:[#allocation6 + $0x2e8] sm:$0xff]
    %v190 = vld [vmem:[#allocation6 + $0x2f0] sm:$0xff]
    %v191 = vld [vmem:[#allocation6 + $0x2f8] sm:$0xff]
    %v192 = vld [vmem:[#allocation6 + $0x300] sm:$0xff]
    %v193 = vld [vmem:[#allocation6 + $0x308] sm:$0xff]
    %v194 = vld [vmem:[#allocation6 + $0x310] sm:$0xff]
    %v195 = vld [vmem:[#allocation6 + $0x318] sm:$0xff]
    %v196 = vld [vmem:[#allocation6 + $0x320] sm:$0xff]
    %v197 = vld [vmem:[#allocation6 + $0x328] sm:$0xff]
    %v198 = vld [vmem:[#allocation6 + $0x330] sm:$0xff]
    %v199 = vld [vmem:[#allocation6 + $0x338] sm:$0xff]
    %v200 = vld [vmem:[#allocation6 + $0x340] sm:$0xff]
    %v201 = vld [vmem:[#allocation6 + $0x348] sm:$0xff]
    %v202 = vld [vmem:[#allocation6 + $0x350] sm:$0xff]
    %v203 = vld [vmem:[#allocation6 + $0x358] sm:$0xff]
    %v204 = vld [vmem:[#allocation6 + $0x360] sm:$0xff]
    %v205 = vld [vmem:[#allocation6 + $0x368] sm:$0xff]
    %v206 = vld [vmem:[#allocation6 + $0x370] sm:$0xff]
    %v207 = vld [vmem:[#allocation6 + $0x378] sm:$0xff]
    %v208 = vld [vmem:[#allocation6 + $0x380] sm:$0xff]
    %v209 = vld [vmem:[#allocation6 + $0x388] sm:$0xff]
    %v210 = vld [vmem:[#allocation6 + $0x390] sm:$0xff]
    %v211 = vld [vmem:[#allocation6 + $0x398] sm:$0xff]
    %v212 = vld [vmem:[#allocation6 + $0x3a0] sm:$0xff]
    %v213 = vld [vmem:[#allocation6 + $0x3a8] sm:$0xff]
    %v214 = vld [vmem:[#allocation6 + $0x3b0] sm:$0xff]
    %v215 = vld [vmem:[#allocation6 + $0x3b8] sm:$0xff]
    %v216 = vld [vmem:[#allocation6 + $0x3c0] sm:$0xff]
    %v217 = vld [vmem:[#allocation6 + $0x3c8] sm:$0xff]
    %v218 = vld [vmem:[#allocation6 + $0x3d0] sm:$0xff]
    %v219 = vld [vmem:[#allocation6 + $0x3d8] sm:$0xff]
    %v220 = vld [vmem:[#allocation6 + $0x3e0] sm:$0xff]
    %v221 = vld [vmem:[#allocation6 + $0x3e8] sm:$0xff]
    %v222 = vld [vmem:[#allocation6 + $0x3f0] sm:$0xff]
    %v223 = vld [vmem:[#allocation6 + $0x3f8] sm:$0xff]
    %v224 = vld [vmem:[#allocation7] sm:$0xff]
    %v225 = vld [vmem:[#allocation7 + $0x8] sm:$0xff]
    %v226 = vld [vmem:[#allocation7 + $0x10] sm:$0xff]
    %v227 = vld [vmem:[#allocation7 + $0x18] sm:$0xff]
    %v228 = vld [vmem:[#allocation7 + $0x20] sm:$0xff]
    %v229 = vld [vmem:[#allocation7 + $0x28] sm:$0xff]
    %v230 = vld [vmem:[#allocation7 + $0x30] sm:$0xff]
    %v231 = vld [vmem:[#allocation7 + $0x38] sm:$0xff]
    %v232 = vld [vmem:[#allocation7 + $0x40] sm:$0xff]
    %v233 = vld [vmem:[#allocation7 + $0x48] sm:$0xff]
    %v234 = vld [vmem:[#allocation7 + $0x50] sm:$0xff]
    %v235 = vld [vmem:[#allocation7 + $0x58] sm:$0xff]
    %v236 = vld [vmem:[#allocation7 + $0x60] sm:$0xff]
    %v237 = vld [vmem:[#allocation7 + $0x68] sm:$0xff]
    %v238 = vld [vmem:[#allocation7 + $0x70] sm:$0xff]
    %v239 = vld [vmem:[#allocation7 + $0x78] sm:$0xff]
    %v240 = vld [vmem:[#allocation7 + $0x80] sm:$0xff]
    %v241 = vld [vmem:[#allocation7 + $0x88] sm:$0xff]
    %v242 = vld [vmem:[#allocation7 + $0x90] sm:$0xff]
    %v243 = vld [vmem:[#allocation7 + $0x98] sm:$0xff]
    %v244 = vld [vmem:[#allocation7 + $0xa0] sm:$0xff]
    %v245 = vld [vmem:[#allocation7 + $0xa8] sm:$0xff]
    %v246 = vld [vmem:[#allocation7 + $0xb0] sm:$0xff]
    %v247 = vld [vmem:[#allocation7 + $0xb8] sm:$0xff]
    %v248 = vld [vmem:[#allocation7 + $0xc0] sm:$0xff]
    %v249 = vld [vmem:[#allocation7 + $0xc8] sm:$0xff]
    %v250 = vld [vmem:[#allocation7 + $0xd0] sm:$0xff]
    %v251 = vld [vmem:[#allocation7 + $0xd8] sm:$0xff]
    %v252 = vld [vmem:[#allocation7 + $0xe0] sm:$0xff]
    %v253 = vld [vmem:[#allocation7 + $0xe8] sm:$0xff]
    %v254 = vld [vmem:[#allocation7 + $0xf0] sm:$0xff]
    %v255 = vld [vmem:[#allocation7 + $0xf8] sm:$0xff]
    %v256 = vld [vmem:[#allocation7 + $0x100] sm:$0xff]
    %v257 = vld [vmem:[#allocation7 + $0x108] sm:$0xff]
    %v258 = vld [vmem:[#allocation7 + $0x110] sm:$0xff]
    %v259 = vld [vmem:[#allocation7 + $0x118] sm:$0xff]
    %v260 = vld [vmem:[#allocation7 + $0x120] sm:$0xff]
    %v261 = vld [vmem:[#allocation7 + $0x128] sm:$0xff]
    %v262 = vld [vmem:[#allocation7 + $0x130] sm:$0xff]
    %v263 = vld [vmem:[#allocation7 + $0x138] sm:$0xff]
    %v264 = vld [vmem:[#allocation7 + $0x140] sm:$0xff]
    %v265 = vld [vmem:[#allocation7 + $0x148] sm:$0xff]
    %v266 = vld [vmem:[#allocation7 + $0x150] sm:$0xff]
    %v267 = vld [vmem:[#allocation7 + $0x158] sm:$0xff]
    %v268 = vld [vmem:[#allocation7 + $0x160] sm:$0xff]
    %v269 = vld [vmem:[#allocation7 + $0x168] sm:$0xff]
    %v270 = vld [vmem:[#allocation7 + $0x170] sm:$0xff]
    %v271 = vld [vmem:[#allocation7 + $0x178] sm:$0xff]
    %v272 = vld [vmem:[#allocation7 + $0x180] sm:$0xff]
    %v273 = vld [vmem:[#allocation7 + $0x188] sm:$0xff]
    %v274 = vld [vmem:[#allocation7 + $0x190] sm:$0xff]
    %v275 = vld [vmem:[#allocation7 + $0x198] sm:$0xff]
    %v276 = vld [vmem:[#allocation7 + $0x1a0] sm:$0xff]
    %v277 = vld [vmem:[#allocation7 + $0x1a8] sm:$0xff]
    %v278 = vld [vmem:[#allocation7 + $0x1b0] sm:$0xff]
    %v279 = vld [vmem:[#allocation7 + $0x1b8] sm:$0xff]
    %v280 = vld [vmem:[#allocation7 + $0x1c0] sm:$0xff]
    %v281 = vld [vmem:[#allocation7 + $0x1c8] sm:$0xff]
    %v282 = vld [vmem:[#allocation7 + $0x1d0] sm:$0xff]
    %v283 = vld [vmem:[#allocation7 + $0x1d8] sm:$0xff]
    %v284 = vld [vmem:[#allocation7 + $0x1e0] sm:$0xff]
    %v285 = vld [vmem:[#allocation7 + $0x1e8] sm:$0xff]
    %v286 = vld [vmem:[#allocation7 + $0x1f0] sm:$0xff]
    %v287 = vld [vmem:[#allocation7 + $0x1f8] sm:$0xff]
    %v288 = vld [vmem:[#allocation9] ss:$8 sm:$0xf]
    %s289 = scalar_lea.vmem [#allocation9], 1
    %v290 = vld [vmem:[%s289] ss:$8 sm:$0xf]
    %s291 = scalar_lea.vmem [#allocation9], 2
    %v292 = vld [vmem:[%s291] ss:$8 sm:$0xf]
    %s293 = scalar_lea.vmem [#allocation9], 3
    %v294 = vld [vmem:[%s293] ss:$8 sm:$0xf]
    %s295 = scalar_lea.vmem [#allocation9], 4
    %v296 = vld [vmem:[%s295] ss:$8 sm:$0xf]
    %s297 = scalar_lea.vmem [#allocation9], 5
    %v298 = vld [vmem:[%s297] ss:$8 sm:$0xf]
    %v299 = vld [vmem:[%s5] ss:$8 sm:$0x3]
    %s300 = scalar_lea.vmem %s5, 1
    %v301 = vld [vmem:[%s300] ss:$8 sm:$0x3]
    %s302 = scalar_lea.vmem %s5, 2
    %v303 = vld [vmem:[%s302] ss:$8 sm:$0x3]
    %s304 = scalar_lea.vmem %s5, 3
    %v305 = vld [vmem:[%s304] ss:$8 sm:$0x3]
    %v306 = vld [vmem:[%s5 + $0x4] ss:$0 sm:$0xff]
    %v307 = vld [vmem:[#allocation2] sm:$0x1]
    %v309 = vlaneseq
    %v310 = vshrl.u32 %v309, 7
    %v311 = vsub.s32 0, %v310
    %v312 = vrot.slane %v288, %v311
    %v313 = vlaneseq
    %v314 = vshrl.u32 %v313, 7
    %v315 = vsub.s32 1, %v314
    %v316 = vrot.slane %v288, %v315
    %v317 = vlaneseq
    %v318 = vshrl.u32 %v317, 7
    %v319 = vsub.s32 2, %v318
    %v320 = vrot.slane %v288, %v319
    %v321 = vlaneseq
    %v322 = vshrl.u32 %v321, 7
    %v323 = vsub.s32 3, %v322
    %v324 = vrot.slane %v288, %v323
    %v337 = vunpack.c.l.b16 %v88
    %v338 = vunpack.c.h.b16 %v88
    %v339 = vunpack.c.l.b16 %v89
    %v340 = vunpack.c.h.b16 %v89
    %v341 = vunpack.c.l.b16 %v90
    %v342 = vunpack.c.h.b16 %v90
    %v343 = vunpack.c.l.b16 %v91
    %v344 = vunpack.c.h.b16 %v91
    %v345 = vunpack.c.l.b16 %v92
    %v346 = vunpack.c.h.b16 %v92
    %v347 = vunpack.c.l.b16 %v93
    %v348 = vunpack.c.h.b16 %v93
    %v349 = vunpack.c.l.b16 %v94
    %v350 = vunpack.c.h.b16 %v94
    %v351 = vunpack.c.l.b16 %v95
    %v352 = vunpack.c.h.b16 %v95
    %v353 = vpack.c.b16 %v341, %v337
    %v354 = vpack.c.b16 %v342, %v338
    %v355 = vpack.c.b16 %v343, %v339
    %v356 = vpack.c.b16 %v344, %v340
    %v357 = vpack.c.b16 %v349, %v345
    %v358 = vpack.c.b16 %v350, %v346
    %v359 = vpack.c.b16 %v351, %v347
    %v360 = vpack.c.b16 %v352, %v348
    %vm369 = vcmask 261120
    %v371 = vsel %vm369, %v307, 0
    %373 = vmatprep.subr.bf16.mxu0 %v354
    %374 = vmatpush1.bf16.msra.mxu0 %v353
    %375 = vmatprep.subr.bf16.mxu0 %v358
    %376 = vmatpush1.bf16.msra.mxu0 %v357
    %377 = vmatprep.subr.bf16.mxu0 0
    %378 = vmatpush1.bf16.msra.mxu0 0
    %379 = vmatprep.subr.bf16.mxu0 0
    %380 = vmatpush1.bf16.msra.mxu0 0
    %381 = vmatprep.subr.bf16.mxu0 0
    %382 = vmatpush1.bf16.msra.mxu0 0
    %383 = vmatprep.subr.bf16.mxu0 0
    %384 = vmatpush1.bf16.msra.mxu0 0
    %385 = vmatprep.subr.bf16.mxu0 0
    %386 = vmatpush1.bf16.msra.mxu0 0
    %387 = vmatprep.subr.bf16.mxu0 0
    %388 = vmatpush1.bf16.msra.mxu0 0
    %389 = vmatprep.subr.bf16.mxu0 0
    %390 = vmatpush1.bf16.msra.mxu0 0
    %391 = vmatprep.subr.bf16.mxu0 0
    %392 = vmatpush1.bf16.msra.mxu0 0
    %393 = vmatprep.subr.bf16.mxu0 0
    %394 = vmatpush1.bf16.msra.mxu0 0
    %395 = vmatprep.subr.bf16.mxu0 0
    %396 = vmatpush1.bf16.msra.mxu0 0
    %397 = vmatprep.subr.bf16.mxu0 0
    %398 = vmatpush1.bf16.msra.mxu0 0
    %399 = vmatprep.subr.bf16.mxu0 0
    %400 = vmatpush1.bf16.msra.mxu0 0
    %401 = vmatprep.subr.bf16.mxu0 0
    %402 = vmatpush1.bf16.msra.mxu0 0
    %403 = vmatprep.subr.bf16.mxu0 0
    %404 = vmatpush1.bf16.msra.mxu0 0
    %405 = vmatprep.mubr.bf16.mxu0 0
    %406 = vmatmul.mubr.bf16.gmra.mrb[0].mxu0 %v371
    %v407 = vpop.f32.mrb[0].mxu0
    %v408 = vadd.f32 %v312, %v407
    %v409 = vpop.f32.mrb[0].mxu0
    %v410 = vadd.f32 %v316, %v409
    %v411 = vpop.f32.mrb[0].mxu0
    %v412 = vpop.f32.mrb[0].mxu0
    %413 = vdwg.mxu0
    %414 = vmatprep.subr.bf16.mxu0 %v356
    %415 = vmatpush1.bf16.msra.mxu0 %v355
    %416 = vmatprep.subr.bf16.mxu0 %v360
    %417 = vmatpush1.bf16.msra.mxu0 %v359
    %418 = vmatprep.subr.bf16.mxu0 0
    %419 = vmatpush1.bf16.msra.mxu0 0
    %420 = vmatprep.subr.bf16.mxu0 0
    %421 = vmatpush1.bf16.msra.mxu0 0
    %422 = vmatprep.subr.bf16.mxu0 0
    %423 = vmatpush1.bf16.msra.mxu0 0
    %424 = vmatprep.subr.bf16.mxu0 0
    %425 = vmatpush1.bf16.msra.mxu0 0
    %426 = vmatprep.subr.bf16.mxu0 0
    %427 = vmatpush1.bf16.msra.mxu0 0
    %428 = vmatprep.subr.bf16.mxu0 0
    %429 = vmatpush1.bf16.msra.mxu0 0
    %430 = vmatprep.subr.bf16.mxu0 0
    %431 = vmatpush1.bf16.msra.mxu0 0
    %432 = vmatprep.subr.bf16.mxu0 0
    %433 = vmatpush1.bf16.msra.mxu0 0
    %434 = vmatprep.subr.bf16.mxu0 0
    %435 = vmatpush1.bf16.msra.mxu0 0
    %436 = vmatprep.subr.bf16.mxu0 0
    %437 = vmatpush1.bf16.msra.mxu0 0
    %438 = vmatprep.subr.bf16.mxu0 0
    %439 = vmatpush1.bf16.msra.mxu0 0
    %440 = vmatprep.subr.bf16.mxu0 0
    %441 = vmatpush1.bf16.msra.mxu0 0
    %442 = vmatprep.subr.bf16.mxu0 0
    %443 = vmatpush1.bf16.msra.mxu0 0
    %444 = vmatprep.subr.bf16.mxu0 0
    %445 = vmatpush1.bf16.msra.mxu0 0
    %446 = vmatprep.mubr.bf16.mxu0 0
    %447 = vmatmul.mubr.bf16.gmra.mrb[0].mxu0 %v371
    %v448 = vpop.f32.mrb[0].mxu0
    %v449 = vadd.f32 %v320, %v448
    %v450 = vpop.f32.mrb[0].mxu0
    %v451 = vadd.f32 %v324, %v450
    %v452 = vpop.f32.mrb[0].mxu0
    %v453 = vpop.f32.mrb[0].mxu0
    %454 = vdwg.mxu0
    %vm455 = vcmask 1041408
    %v456 = vsel %vm455, %v408, 0.0
    %v457 = vsel %vm455, %v410, 0.0
    %v458 = vadd.f32 %v456, %v457
    %v459 = vsel %vm455, %v449, 0.0
    %v460 = vadd.f32 %v458, %v459
    %v461 = vsel %vm455, %v451, 0.0
    %v462 = vadd.f32 %v460, %v461
    %463 = vadd.xlane.f32.xlu0 %v462
    %v464 = vpop.xlane.xlu0 %463
    %v465 = vmul.f32 %v408, %v408
    %v466 = vmul.f32 %v410, %v410
    %v467 = vmul.f32 %v449, %v449
    %v468 = vmul.f32 %v451, %v451
    %v469 = vsel %vm455, %v465, 0.0
    %v470 = vsel %vm455, %v466, 0.0
    %v471 = vadd.f32 %v469, %v470
    %v472 = vsel %vm455, %v467, 0.0
    %v473 = vadd.f32 %v471, %v472
    %v474 = vsel %vm455, %v468, 0.0
    %v475 = vadd.f32 %v473, %v474
    %476 = vadd.xlane.f32.xlu0 %v475
    %v477 = vpop.xlane.xlu0 %476
    %v478 = vmul.f32 %v464, 0.001953125
    %v479 = vmul.f32 %v477, 0.001953125
    %v480 = vmul.f32 %v478, %v478
    %v481 = vsub.f32 %v479, %v480
    %v482 = vmax.f32 %v481, 0.0
    %v483 = vadd.f32 %v482, 1e-05
    %v484 = vrsqrt.pop %v483
    %v485 = vpack.c.bf16 %v408, %v408
    %v486 = vpack.c.bf16 %v410, %v410
    %v487 = vpack.c.bf16 %v449, %v449
    %v488 = vpack.c.bf16 %v451, %v451
    %v489 = vpack.c.bf16 %v478, %v478
    %v490 = vsub.bf16 %v485, %v489
    %v491 = vsub.bf16 %v486, %v489
    %v492 = vsub.bf16 %v487, %v489
    %v493 = vsub.bf16 %v488, %v489
    %v494 = vpack.c.bf16 %v484, %v484
    %v495 = vmul.bf16 %v490, %v494
    %v496 = vmul.bf16 %v491, %v494
    %v497 = vmul.bf16 %v492, %v494
    %v498 = vmul.bf16 %v493, %v494
    %v500 = vlaneseq
    %v501 = vshrl.u32 %v500, 7
    %v502 = vsub.s32 0, %v501
    %v503 = vrot.slane %v290, %v502
    %v504 = vlaneseq
    %v505 = vshrl.u32 %v504, 7
    %v506 = vsub.s32 1, %v505
    %v507 = vrot.slane %v290, %v506
    %v508 = vlaneseq
    %v509 = vshrl.u32 %v508, 7
    %v510 = vsub.s32 2, %v509
    %v511 = vrot.slane %v290, %v510
    %v512 = vlaneseq
    %v513 = vshrl.u32 %v512, 7
    %v514 = vsub.s32 3, %v513
    %v515 = vrot.slane %v290, %v514
    %v520 = vpack.c.bf16 %v503, %v503
    %v521 = vpack.c.bf16 %v507, %v507
    %v522 = vpack.c.bf16 %v511, %v511
    %v523 = vpack.c.bf16 %v515, %v515
    %v525 = vpack.i.b16 %v520, %v520
    %v527 = vlaneseq
    %v528 = vshrl.u32 %v527, 7
    %v529 = vsub.s32 0, %v528
    %v530 = vrot.slane %v525, %v529
    %v532 = vpack.i.b16 %v521, %v521
    %v534 = vlaneseq
    %v535 = vshrl.u32 %v534, 7
    %v536 = vsub.s32 0, %v535
    %v537 = vrot.slane %v532, %v536
    %v539 = vpack.i.b16 %v522, %v522
    %v541 = vlaneseq
    %v542 = vshrl.u32 %v541, 7
    %v543 = vsub.s32 0, %v542
    %v544 = vrot.slane %v539, %v543
    %v546 = vpack.i.b16 %v523, %v523
    %v548 = vlaneseq
    %v549 = vshrl.u32 %v548, 7
    %v550 = vsub.s32 0, %v549
    %v551 = vrot.slane %v546, %v550
    %v552 = vmul.bf16 %v495, %v530
    %v553 = vmul.bf16 %v496, %v537
    %v554 = vmul.bf16 %v497, %v544
    %v555 = vmul.bf16 %v498, %v551
    %v557 = vlaneseq
    %v558 = vshrl.u32 %v557, 7
    %v559 = vsub.s32 0, %v558
    %v560 = vrot.slane %v292, %v559
    %v561 = vlaneseq
    %v562 = vshrl.u32 %v561, 7
    %v563 = vsub.s32 1, %v562
    %v564 = vrot.slane %v292, %v563
    %v565 = vlaneseq
    %v566 = vshrl.u32 %v565, 7
    %v567 = vsub.s32 2, %v566
    %v568 = vrot.slane %v292, %v567
    %v569 = vlaneseq
    %v570 = vshrl.u32 %v569, 7
    %v571 = vsub.s32 3, %v570
    %v572 = vrot.slane %v292, %v571
    %v577 = vpack.c.bf16 %v560, %v560
    %v578 = vpack.c.bf16 %v564, %v564
    %v579 = vpack.c.bf16 %v568, %v568
    %v580 = vpack.c.bf16 %v572, %v572
    %v582 = vpack.i.b16 %v577, %v577
    %v584 = vlaneseq
    %v585 = vshrl.u32 %v584, 7
    %v586 = vsub.s32 0, %v585
    %v587 = vrot.slane %v582, %v586
    %v589 = vpack.i.b16 %v578, %v578
    %v591 = vlaneseq
    %v592 = vshrl.u32 %v591, 7
    %v593 = vsub.s32 0, %v592
    %v594 = vrot.slane %v589, %v593
    %v596 = vpack.i.b16 %v579, %v579
    %v598 = vlaneseq
    %v599 = vshrl.u32 %v598, 7
    %v600 = vsub.s32 0, %v599
    %v601 = vrot.slane %v596, %v600
    %v603 = vpack.i.b16 %v580, %v580
    %v605 = vlaneseq
    %v606 = vshrl.u32 %v605, 7
    %v607 = vsub.s32 0, %v606
    %v608 = vrot.slane %v603, %v607
    %v609 = vadd.bf16 %v552, %v587
    %v610 = vadd.bf16 %v553, %v594
    %v611 = vadd.bf16 %v554, %v601
    %v612 = vadd.bf16 %v555, %v608
    %v613 = vmax.bf16 %v609, 0
    %v614 = vmax.bf16 %v610, 0
    %v615 = vmax.bf16 %v611, 0
    %v616 = vmax.bf16 %v612, 0
    %v618 = vlaneseq
    %v619 = vshrl.u32 %v618, 7
    %v620 = vsub.s32 0, %v619
    %v621 = vrot.slane %v294, %v620
    %v622 = vlaneseq
    %v623 = vshrl.u32 %v622, 7
    %v624 = vsub.s32 1, %v623
    %v625 = vrot.slane %v294, %v624
    %v626 = vlaneseq
    %v627 = vshrl.u32 %v626, 7
    %v628 = vsub.s32 2, %v627
    %v629 = vrot.slane %v294, %v628
    %v630 = vlaneseq
    %v631 = vshrl.u32 %v630, 7
    %v632 = vsub.s32 3, %v631
    %v633 = vrot.slane %v294, %v632
    %v766 = vunpack.c.l.b16 %v96
    %v767 = vunpack.c.h.b16 %v96
    %v768 = vunpack.c.l.b16 %v97
    %v769 = vunpack.c.h.b16 %v97
    %v770 = vunpack.c.l.b16 %v98
    %v771 = vunpack.c.h.b16 %v98
    %v772 = vunpack.c.l.b16 %v99
    %v773 = vunpack.c.h.b16 %v99
    %v774 = vunpack.c.l.b16 %v100
    %v775 = vunpack.c.h.b16 %v100
    %v776 = vunpack.c.l.b16 %v101
    %v777 = vunpack.c.h.b16 %v101
    %v778 = vunpack.c.l.b16 %v102
    %v779 = vunpack.c.h.b16 %v102
    %v780 = vunpack.c.l.b16 %v103
    %v781 = vunpack.c.h.b16 %v103
    %v782 = vunpack.c.l.b16 %v104
    %v783 = vunpack.c.h.b16 %v104
    %v784 = vunpack.c.l.b16 %v105
    %v785 = vunpack.c.h.b16 %v105
    %v786 = vunpack.c.l.b16 %v106
    %v787 = vunpack.c.h.b16 %v106
    %v788 = vunpack.c.l.b16 %v107
    %v789 = vunpack.c.h.b16 %v107
    %v790 = vunpack.c.l.b16 %v108
    %v791 = vunpack.c.h.b16 %v108
    %v792 = vunpack.c.l.b16 %v109
    %v793 = vunpack.c.h.b16 %v109
    %v794 = vunpack.c.l.b16 %v110
    %v795 = vunpack.c.h.b16 %v110
    %v796 = vunpack.c.l.b16 %v111
    %v797 = vunpack.c.h.b16 %v111
    %v798 = vunpack.c.l.b16 %v112
    %v799 = vunpack.c.h.b16 %v112
    %v800 = vunpack.c.l.b16 %v113
    %v801 = vunpack.c.h.b16 %v113
    %v802 = vunpack.c.l.b16 %v114
    %v803 = vunpack.c.h.b16 %v114
    %v804 = vunpack.c.l.b16 %v115
    %v805 = vunpack.c.h.b16 %v115
    %v806 = vunpack.c.l.b16 %v116
    %v807 = vunpack.c.h.b16 %v116
    %v808 = vunpack.c.l.b16 %v117
    %v809 = vunpack.c.h.b16 %v117
    %v810 = vunpack.c.l.b16 %v118
    %v811 = vunpack.c.h.b16 %v118
    %v812 = vunpack.c.l.b16 %v119
    %v813 = vunpack.c.h.b16 %v119
    %v814 = vunpack.c.l.b16 %v120
    %v815 = vunpack.c.h.b16 %v120
    %v816 = vunpack.c.l.b16 %v121
    %v817 = vunpack.c.h.b16 %v121
    %v818 = vunpack.c.l.b16 %v122
    %v819 = vunpack.c.h.b16 %v122
    %v820 = vunpack.c.l.b16 %v123
    %v821 = vunpack.c.h.b16 %v123
    %v822 = vunpack.c.l.b16 %v124
    %v823 = vunpack.c.h.b16 %v124
    %v824 = vunpack.c.l.b16 %v125
    %v825 = vunpack.c.h.b16 %v125
    %v826 = vunpack.c.l.b16 %v126
    %v827 = vunpack.c.h.b16 %v126
    %v828 = vunpack.c.l.b16 %v127
    %v829 = vunpack.c.h.b16 %v127
    %v830 = vunpack.c.l.b16 %v128
    %v831 = vunpack.c.h.b16 %v128
    %v832 = vunpack.c.l.b16 %v129
    %v833 = vunpack.c.h.b16 %v129
    %v834 = vunpack.c.l.b16 %v130
    %v835 = vunpack.c.h.b16 %v130
    %v836 = vunpack.c.l.b16 %v131
    %v837 = vunpack.c.h.b16 %v131
    %v838 = vunpack.c.l.b16 %v132
    %v839 = vunpack.c.h.b16 %v132
    %v840 = vunpack.c.l.b16 %v133
    %v841 = vunpack.c.h.b16 %v133
    %v842 = vunpack.c.l.b16 %v134
    %v843 = vunpack.c.h.b16 %v134
    %v844 = vunpack.c.l.b16 %v135
    %v845 = vunpack.c.h.b16 %v135
    %v846 = vunpack.c.l.b16 %v136
    %v847 = vunpack.c.h.b16 %v136
    %v848 = vunpack.c.l.b16 %v137
    %v849 = vunpack.c.h.b16 %v137
    %v850 = vunpack.c.l.b16 %v138
    %v851 = vunpack.c.h.b16 %v138
    %v852 = vunpack.c.l.b16 %v139
    %v853 = vunpack.c.h.b16 %v139
    %v854 = vunpack.c.l.b16 %v140
    %v855 = vunpack.c.h.b16 %v140
    %v856 = vunpack.c.l.b16 %v141
    %v857 = vunpack.c.h.b16 %v141
    %v858 = vunpack.c.l.b16 %v142
    %v859 = vunpack.c.h.b16 %v142
    %v860 = vunpack.c.l.b16 %v143
    %v861 = vunpack.c.h.b16 %v143
    %v862 = vunpack.c.l.b16 %v144
    %v863 = vunpack.c.h.b16 %v144
    %v864 = vunpack.c.l.b16 %v145
    %v865 = vunpack.c.h.b16 %v145
    %v866 = vunpack.c.l.b16 %v146
    %v867 = vunpack.c.h.b16 %v146
    %v868 = vunpack.c.l.b16 %v147
    %v869 = vunpack.c.h.b16 %v147
    %v870 = vunpack.c.l.b16 %v148
    %v871 = vunpack.c.h.b16 %v148
    %v872 = vunpack.c.l.b16 %v149
    %v873 = vunpack.c.h.b16 %v149
    %v874 = vunpack.c.l.b16 %v150
    %v875 = vunpack.c.h.b16 %v150
    %v876 = vunpack.c.l.b16 %v151
    %v877 = vunpack.c.h.b16 %v151
    %v878 = vunpack.c.l.b16 %v152
    %v879 = vunpack.c.h.b16 %v152
    %v880 = vunpack.c.l.b16 %v153
    %v881 = vunpack.c.h.b16 %v153
    %v882 = vunpack.c.l.b16 %v154
    %v883 = vunpack.c.h.b16 %v154
    %v884 = vunpack.c.l.b16 %v155
    %v885 = vunpack.c.h.b16 %v155
    %v886 = vunpack.c.l.b16 %v156
    %v887 = vunpack.c.h.b16 %v156
    %v888 = vunpack.c.l.b16 %v157
    %v889 = vunpack.c.h.b16 %v157
    %v890 = vunpack.c.l.b16 %v158
    %v891 = vunpack.c.h.b16 %v158
    %v892 = vunpack.c.l.b16 %v159
    %v893 = vunpack.c.h.b16 %v159
    %v894 = vunpack.c.l.b16 %v160
    %v895 = vunpack.c.h.b16 %v160
    %v896 = vunpack.c.l.b16 %v161
    %v897 = vunpack.c.h.b16 %v161
    %v898 = vunpack.c.l.b16 %v162
    %v899 = vunpack.c.h.b16 %v162
    %v900 = vunpack.c.l.b16 %v163
    %v901 = vunpack.c.h.b16 %v163
    %v902 = vunpack.c.l.b16 %v164
    %v903 = vunpack.c.h.b16 %v164
    %v904 = vunpack.c.l.b16 %v165
    %v905 = vunpack.c.h.b16 %v165
    %v906 = vunpack.c.l.b16 %v166
    %v907 = vunpack.c.h.b16 %v166
    %v908 = vunpack.c.l.b16 %v167
    %v909 = vunpack.c.h.b16 %v167
    %v910 = vunpack.c.l.b16 %v168
    %v911 = vunpack.c.h.b16 %v168
    %v912 = vunpack.c.l.b16 %v169
    %v913 = vunpack.c.h.b16 %v169
    %v914 = vunpack.c.l.b16 %v170
    %v915 = vunpack.c.h.b16 %v170
    %v916 = vunpack.c.l.b16 %v171
    %v917 = vunpack.c.h.b16 %v171
    %v918 = vunpack.c.l.b16 %v172
    %v919 = vunpack.c.h.b16 %v172
    %v920 = vunpack.c.l.b16 %v173
    %v921 = vunpack.c.h.b16 %v173
    %v922 = vunpack.c.l.b16 %v174
    %v923 = vunpack.c.h.b16 %v174
    %v924 = vunpack.c.l.b16 %v175
    %v925 = vunpack.c.h.b16 %v175
    %v926 = vunpack.c.l.b16 %v176
    %v927 = vunpack.c.h.b16 %v176
    %v928 = vunpack.c.l.b16 %v177
    %v929 = vunpack.c.h.b16 %v177
    %v930 = vunpack.c.l.b16 %v178
    %v931 = vunpack.c.h.b16 %v178
    %v932 = vunpack.c.l.b16 %v179
    %v933 = vunpack.c.h.b16 %v179
    %v934 = vunpack.c.l.b16 %v180
    %v935 = vunpack.c.h.b16 %v180
    %v936 = vunpack.c.l.b16 %v181
    %v937 = vunpack.c.h.b16 %v181
    %v938 = vunpack.c.l.b16 %v182
    %v939 = vunpack.c.h.b16 %v182
    %v940 = vunpack.c.l.b16 %v183
    %v941 = vunpack.c.h.b16 %v183
    %v942 = vunpack.c.l.b16 %v184
    %v943 = vunpack.c.h.b16 %v184
    %v944 = vunpack.c.l.b16 %v185
    %v945 = vunpack.c.h.b16 %v185
    %v946 = vunpack.c.l.b16 %v186
    %v947 = vunpack.c.h.b16 %v186
    %v948 = vunpack.c.l.b16 %v187
    %v949 = vunpack.c.h.b16 %v187
    %v950 = vunpack.c.l.b16 %v188
    %v951 = vunpack.c.h.b16 %v188
    %v952 = vunpack.c.l.b16 %v189
    %v953 = vunpack.c.h.b16 %v189
    %v954 = vunpack.c.l.b16 %v190
    %v955 = vunpack.c.h.b16 %v190
    %v956 = vunpack.c.l.b16 %v191
    %v957 = vunpack.c.h.b16 %v191
    %v958 = vunpack.c.l.b16 %v192
    %v959 = vunpack.c.h.b16 %v192
    %v960 = vunpack.c.l.b16 %v193
    %v961 = vunpack.c.h.b16 %v193
    %v962 = vunpack.c.l.b16 %v194
    %v963 = vunpack.c.h.b16 %v194
    %v964 = vunpack.c.l.b16 %v195
    %v965 = vunpack.c.h.b16 %v195
    %v966 = vunpack.c.l.b16 %v196
    %v967 = vunpack.c.h.b16 %v196
    %v968 = vunpack.c.l.b16 %v197
    %v969 = vunpack.c.h.b16 %v197
    %v970 = vunpack.c.l.b16 %v198
    %v971 = vunpack.c.h.b16 %v198
    %v972 = vunpack.c.l.b16 %v199
    %v973 = vunpack.c.h.b16 %v199
    %v974 = vunpack.c.l.b16 %v200
    %v975 = vunpack.c.h.b16 %v200
    %v976 = vunpack.c.l.b16 %v201
    %v977 = vunpack.c.h.b16 %v201
    %v978 = vunpack.c.l.b16 %v202
    %v979 = vunpack.c.h.b16 %v202
    %v980 = vunpack.c.l.b16 %v203
    %v981 = vunpack.c.h.b16 %v203
    %v982 = vunpack.c.l.b16 %v204
    %v983 = vunpack.c.h.b16 %v204
    %v984 = vunpack.c.l.b16 %v205
    %v985 = vunpack.c.h.b16 %v205
    %v986 = vunpack.c.l.b16 %v206
    %v987 = vunpack.c.h.b16 %v206
    %v988 = vunpack.c.l.b16 %v207
    %v989 = vunpack.c.h.b16 %v207
    %v990 = vunpack.c.l.b16 %v208
    %v991 = vunpack.c.h.b16 %v208
    %v992 = vunpack.c.l.b16 %v209
    %v993 = vunpack.c.h.b16 %v209
    %v994 = vunpack.c.l.b16 %v210
    %v995 = vunpack.c.h.b16 %v210
    %v996 = vunpack.c.l.b16 %v211
    %v997 = vunpack.c.h.b16 %v211
    %v998 = vunpack.c.l.b16 %v212
    %v999 = vunpack.c.h.b16 %v212
    %v1000 = vunpack.c.l.b16 %v213
    %v1001 = vunpack.c.h.b16 %v213
    %v1002 = vunpack.c.l.b16 %v214
    %v1003 = vunpack.c.h.b16 %v214
    %v1004 = vunpack.c.l.b16 %v215
    %v1005 = vunpack.c.h.b16 %v215
    %v1006 = vunpack.c.l.b16 %v216
    %v1007 = vunpack.c.h.b16 %v216
    %v1008 = vunpack.c.l.b16 %v217
    %v1009 = vunpack.c.h.b16 %v217
    %v1010 = vunpack.c.l.b16 %v218
    %v1011 = vunpack.c.h.b16 %v218
    %v1012 = vunpack.c.l.b16 %v219
    %v1013 = vunpack.c.h.b16 %v219
    %v1014 = vunpack.c.l.b16 %v220
    %v1015 = vunpack.c.h.b16 %v220
    %v1016 = vunpack.c.l.b16 %v221
    %v1017 = vunpack.c.h.b16 %v221
    %v1018 = vunpack.c.l.b16 %v222
    %v1019 = vunpack.c.h.b16 %v222
    %v1020 = vunpack.c.l.b16 %v223
    %v1021 = vunpack.c.h.b16 %v223
    %v1022 = vpack.c.b16 %v770, %v766
    %v1023 = vpack.c.b16 %v771, %v767
    %v1024 = vpack.c.b16 %v772, %v768
    %v1025 = vpack.c.b16 %v773, %v769
    %v1026 = vpack.c.b16 %v778, %v774
    %v1027 = vpack.c.b16 %v779, %v775
    %v1028 = vpack.c.b16 %v780, %v776
    %v1029 = vpack.c.b16 %v781, %v777
    %v1030 = vpack.c.b16 %v786, %v782
    %v1031 = vpack.c.b16 %v787, %v783
    %v1032 = vpack.c.b16 %v788, %v784
    %v1033 = vpack.c.b16 %v789, %v785
    %v1034 = vpack.c.b16 %v794, %v790
    %v1035 = vpack.c.b16 %v795, %v791
    %v1036 = vpack.c.b16 %v796, %v792
    %v1037 = vpack.c.b16 %v797, %v793
    %v1038 = vpack.c.b16 %v802, %v798
    %v1039 = vpack.c.b16 %v803, %v799
    %v1040 = vpack.c.b16 %v804, %v800
    %v1041 = vpack.c.b16 %v805, %v801
    %v1042 = vpack.c.b16 %v810, %v806
    %v1043 = vpack.c.b16 %v811, %v807
    %v1044 = vpack.c.b16 %v812, %v808
    %v1045 = vpack.c.b16 %v813, %v809
    %v1046 = vpack.c.b16 %v818, %v814
    %v1047 = vpack.c.b16 %v819, %v815
    %v1048 = vpack.c.b16 %v820, %v816
    %v1049 = vpack.c.b16 %v821, %v817
    %v1050 = vpack.c.b16 %v826, %v822
    %v1051 = vpack.c.b16 %v827, %v823
    %v1052 = vpack.c.b16 %v828, %v824
    %v1053 = vpack.c.b16 %v829, %v825
    %v1054 = vpack.c.b16 %v834, %v830
    %v1055 = vpack.c.b16 %v835, %v831
    %v1056 = vpack.c.b16 %v836, %v832
    %v1057 = vpack.c.b16 %v837, %v833
    %v1058 = vpack.c.b16 %v842, %v838
    %v1059 = vpack.c.b16 %v843, %v839
    %v1060 = vpack.c.b16 %v844, %v840
    %v1061 = vpack.c.b16 %v845, %v841
    %v1062 = vpack.c.b16 %v850, %v846
    %v1063 = vpack.c.b16 %v851, %v847
    %v1064 = vpack.c.b16 %v852, %v848
    %v1065 = vpack.c.b16 %v853, %v849
    %v1066 = vpack.c.b16 %v858, %v854
    %v1067 = vpack.c.b16 %v859, %v855
    %v1068 = vpack.c.b16 %v860, %v856
    %v1069 = vpack.c.b16 %v861, %v857
    %v1070 = vpack.c.b16 %v866, %v862
    %v1071 = vpack.c.b16 %v867, %v863
    %v1072 = vpack.c.b16 %v868, %v864
    %v1073 = vpack.c.b16 %v869, %v865
    %v1074 = vpack.c.b16 %v874, %v870
    %v1075 = vpack.c.b16 %v875, %v871
    %v1076 = vpack.c.b16 %v876, %v872
    %v1077 = vpack.c.b16 %v877, %v873
    %v1078 = vpack.c.b16 %v882, %v878
    %v1079 = vpack.c.b16 %v883, %v879
    %v1080 = vpack.c.b16 %v884, %v880
    %v1081 = vpack.c.b16 %v885, %v881
    %v1082 = vpack.c.b16 %v890, %v886
    %v1083 = vpack.c.b16 %v891, %v887
    %v1084 = vpack.c.b16 %v892, %v888
    %v1085 = vpack.c.b16 %v893, %v889
    %v1086 = vpack.c.b16 %v898, %v894
    %v1087 = vpack.c.b16 %v899, %v895
    %v1088 = vpack.c.b16 %v900, %v896
    %v1089 = vpack.c.b16 %v901, %v897
    %v1090 = vpack.c.b16 %v906, %v902
    %v1091 = vpack.c.b16 %v907, %v903
    %v1092 = vpack.c.b16 %v908, %v904
    %v1093 = vpack.c.b16 %v909, %v905
    %v1094 = vpack.c.b16 %v914, %v910
    %v1095 = vpack.c.b16 %v915, %v911
    %v1096 = vpack.c.b16 %v916, %v912
    %v1097 = vpack.c.b16 %v917, %v913
    %v1098 = vpack.c.b16 %v922, %v918
    %v1099 = vpack.c.b16 %v923, %v919
    %v1100 = vpack.c.b16 %v924, %v920
    %v1101 = vpack.c.b16 %v925, %v921
    %v1102 = vpack.c.b16 %v930, %v926
    %v1103 = vpack.c.b16 %v931, %v927
    %v1104 = vpack.c.b16 %v932, %v928
    %v1105 = vpack.c.b16 %v933, %v929
    %v1106 = vpack.c.b16 %v938, %v934
    %v1107 = vpack.c.b16 %v939, %v935
    %v1108 = vpack.c.b16 %v940, %v936
    %v1109 = vpack.c.b16 %v941, %v937
    %v1110 = vpack.c.b16 %v946, %v942
    %v1111 = vpack.c.b16 %v947, %v943
    %v1112 = vpack.c.b16 %v948, %v944
    %v1113 = vpack.c.b16 %v949, %v945
    %v1114 = vpack.c.b16 %v954, %v950
    %v1115 = vpack.c.b16 %v955, %v951
    %v1116 = vpack.c.b16 %v956, %v952
    %v1117 = vpack.c.b16 %v957, %v953
    %v1118 = vpack.c.b16 %v962, %v958
    %v1119 = vpack.c.b16 %v963, %v959
    %v1120 = vpack.c.b16 %v964, %v960
    %v1121 = vpack.c.b16 %v965, %v961
    %v1122 = vpack.c.b16 %v970, %v966
    %v1123 = vpack.c.b16 %v971, %v967
    %v1124 = vpack.c.b16 %v972, %v968
    %v1125 = vpack.c.b16 %v973, %v969
    %v1126 = vpack.c.b16 %v978, %v974
    %v1127 = vpack.c.b16 %v979, %v975
    %v1128 = vpack.c.b16 %v980, %v976
    %v1129 = vpack.c.b16 %v981, %v977
    %v1130 = vpack.c.b16 %v986, %v982
    %v1131 = vpack.c.b16 %v987, %v983
    %v1132 = vpack.c.b16 %v988, %v984
    %v1133 = vpack.c.b16 %v989, %v985
    %v1134 = vpack.c.b16 %v994, %v990
    %v1135 = vpack.c.b16 %v995, %v991
    %v1136 = vpack.c.b16 %v996, %v992
    %v1137 = vpack.c.b16 %v997, %v993
    %v1138 = vpack.c.b16 %v1002, %v998
    %v1139 = vpack.c.b16 %v1003, %v999
    %v1140 = vpack.c.b16 %v1004, %v1000
    %v1141 = vpack.c.b16 %v1005, %v1001
    %v1142 = vpack.c.b16 %v1010, %v1006
    %v1143 = vpack.c.b16 %v1011, %v1007
    %v1144 = vpack.c.b16 %v1012, %v1008
    %v1145 = vpack.c.b16 %v1013, %v1009
    %v1146 = vpack.c.b16 %v1018, %v1014
    %v1147 = vpack.c.b16 %v1019, %v1015
    %v1148 = vpack.c.b16 %v1020, %v1016
    %v1149 = vpack.c.b16 %v1021, %v1017
    %1278 = vmatprep.subr.bf16.mxu0 %v1023
    %1279 = vmatpush1.bf16.msra.mxu0 %v1022
    %1280 = vmatprep.subr.bf16.mxu0 %v1027
    %1281 = vmatpush1.bf16.msra.mxu0 %v1026
    %1282 = vmatprep.subr.bf16.mxu0 %v1031
    %1283 = vmatpush1.bf16.msra.mxu0 %v1030
    %1284 = vmatprep.subr.bf16.mxu0 %v1035
    %1285 = vmatpush1.bf16.msra.mxu0 %v1034
    %1286 = vmatprep.subr.bf16.mxu0 %v1039
    %1287 = vmatpush1.bf16.msra.mxu0 %v1038
    %1288 = vmatprep.subr.bf16.mxu0 %v1043
    %1289 = vmatpush1.bf16.msra.mxu0 %v1042
    %1290 = vmatprep.subr.bf16.mxu0 %v1047
    %1291 = vmatpush1.bf16.msra.mxu0 %v1046
    %1292 = vmatprep.subr.bf16.mxu0 %v1051
    %1293 = vmatpush1.bf16.msra.mxu0 %v1050
    %1294 = vmatprep.subr.bf16.mxu0 %v1055
    %1295 = vmatpush1.bf16.msra.mxu0 %v1054
    %1296 = vmatprep.subr.bf16.mxu0 %v1059
    %1297 = vmatpush1.bf16.msra.mxu0 %v1058
    %1298 = vmatprep.subr.bf16.mxu0 %v1063
    %1299 = vmatpush1.bf16.msra.mxu0 %v1062
    %1300 = vmatprep.subr.bf16.mxu0 %v1067
    %1301 = vmatpush1.bf16.msra.mxu0 %v1066
    %1302 = vmatprep.subr.bf16.mxu0 %v1071
    %1303 = vmatpush1.bf16.msra.mxu0 %v1070
    %1304 = vmatprep.subr.bf16.mxu0 %v1075
    %1305 = vmatpush1.bf16.msra.mxu0 %v1074
    %1306 = vmatprep.subr.bf16.mxu0 %v1079
    %1307 = vmatpush1.bf16.msra.mxu0 %v1078
    %1308 = vmatprep.subr.bf16.mxu0 %v1083
    %1309 = vmatpush1.bf16.msra.mxu0 %v1082
    %1310 = vmatprep.mubr.bf16.mxu0 %v614
    %1311 = vmatmul.mubr.bf16.gmra.mrb[0].mxu0 %v613
    %v1312 = vpop.f32.mrb[0].mxu0
    %v1313 = vadd.f32 %v621, %v1312
    %v1314 = vpop.f32.mrb[0].mxu0
    %v1315 = vadd.f32 %v625, %v1314
    %v1316 = vpop.f32.mrb[0].mxu0
    %v1317 = vpop.f32.mrb[0].mxu0
    %1318 = vdwg.mxu0
    %1319 = vmatprep.subr.bf16.mxu0 %v1087
    %1320 = vmatpush1.bf16.msra.mxu0 %v1086
    %1321 = vmatprep.subr.bf16.mxu0 %v1091
    %1322 = vmatpush1.bf16.msra.mxu0 %v1090
    %1323 = vmatprep.subr.bf16.mxu0 %v1095
    %1324 = vmatpush1.bf16.msra.mxu0 %v1094
    %1325 = vmatprep.subr.bf16.mxu0 %v1099
    %1326 = vmatpush1.bf16.msra.mxu0 %v1098
    %1327 = vmatprep.subr.bf16.mxu0 %v1103
    %1328 = vmatpush1.bf16.msra.mxu0 %v1102
    %1329 = vmatprep.subr.bf16.mxu0 %v1107
    %1330 = vmatpush1.bf16.msra.mxu0 %v1106
    %1331 = vmatprep.subr.bf16.mxu0 %v1111
    %1332 = vmatpush1.bf16.msra.mxu0 %v1110
    %1333 = vmatprep.subr.bf16.mxu0 %v1115
    %1334 = vmatpush1.bf16.msra.mxu0 %v1114
    %1335 = vmatprep.subr.bf16.mxu0 %v1119
    %1336 = vmatpush1.bf16.msra.mxu0 %v1118
    %1337 = vmatprep.subr.bf16.mxu0 %v1123
    %1338 = vmatpush1.bf16.msra.mxu0 %v1122
    %1339 = vmatprep.subr.bf16.mxu0 %v1127
    %1340 = vmatpush1.bf16.msra.mxu0 %v1126
    %1341 = vmatprep.subr.bf16.mxu0 %v1131
    %1342 = vmatpush1.bf16.msra.mxu0 %v1130
    %1343 = vmatprep.subr.bf16.mxu0 %v1135
    %1344 = vmatpush1.bf16.msra.mxu0 %v1134
    %1345 = vmatprep.subr.bf16.mxu0 %v1139
    %1346 = vmatpush1.bf16.msra.mxu0 %v1138
    %1347 = vmatprep.subr.bf16.mxu0 %v1143
    %1348 = vmatpush1.bf16.msra.mxu0 %v1142
    %1349 = vmatprep.subr.bf16.mxu0 %v1147
    %1350 = vmatpush1.bf16.msra.mxu0 %v1146
    %1351 = vmatprep.mubr.bf16.mxu0 %v616
    %1352 = vmatmul.mubr.bf16.gmra.mrb[0].mxu0 %v615
    %v1353 = vpop.f32.mrb[0].mxu0
    %v1354 = vadd.f32 %v1313, %v1353
    %v1355 = vpop.f32.mrb[0].mxu0
    %v1356 = vadd.f32 %v1315, %v1355
    %v1357 = vpop.f32.mrb[0].mxu0
    %v1358 = vpop.f32.mrb[0].mxu0
    %1359 = vdwg.mxu0
    %1360 = vmatprep.subr.bf16.mxu0 %v1025
    %1361 = vmatpush1.bf16.msra.mxu0 %v1024
    %1362 = vmatprep.subr.bf16.mxu0 %v1029
    %1363 = vmatpush1.bf16.msra.mxu0 %v1028
    %1364 = vmatprep.subr.bf16.mxu0 %v1033
    %1365 = vmatpush1.bf16.msra.mxu0 %v1032
    %1366 = vmatprep.subr.bf16.mxu0 %v1037
    %1367 = vmatpush1.bf16.msra.mxu0 %v1036
    %1368 = vmatprep.subr.bf16.mxu0 %v1041
    %1369 = vmatpush1.bf16.msra.mxu0 %v1040
    %1370 = vmatprep.subr.bf16.mxu0 %v1045
    %1371 = vmatpush1.bf16.msra.mxu0 %v1044
    %1372 = vmatprep.subr.bf16.mxu0 %v1049
    %1373 = vmatpush1.bf16.msra.mxu0 %v1048
    %1374 = vmatprep.subr.bf16.mxu0 %v1053
    %1375 = vmatpush1.bf16.msra.mxu0 %v1052
    %1376 = vmatprep.subr.bf16.mxu0 %v1057
    %1377 = vmatpush1.bf16.msra.mxu0 %v1056
    %1378 = vmatprep.subr.bf16.mxu0 %v1061
    %1379 = vmatpush1.bf16.msra.mxu0 %v1060
    %1380 = vmatprep.subr.bf16.mxu0 %v1065
    %1381 = vmatpush1.bf16.msra.mxu0 %v1064
    %1382 = vmatprep.subr.bf16.mxu0 %v1069
    %1383 = vmatpush1.bf16.msra.mxu0 %v1068
    %1384 = vmatprep.subr.bf16.mxu0 %v1073
    %1385 = vmatpush1.bf16.msra.mxu0 %v1072
    %1386 = vmatprep.subr.bf16.mxu0 %v1077
    %1387 = vmatpush1.bf16.msra.mxu0 %v1076
    %1388 = vmatprep.subr.bf16.mxu0 %v1081
    %1389 = vmatpush1.bf16.msra.mxu0 %v1080
    %1390 = vmatprep.subr.bf16.mxu0 %v1085
    %1391 = vmatpush1.bf16.msra.mxu0 %v1084
    %1392 = vmatprep.mubr.bf16.mxu0 %v614
    %1393 = vmatmul.mubr.bf16.gmra.mrb[0].mxu0 %v613
    %v1394 = vpop.f32.mrb[0].mxu0
    %v1395 = vadd.f32 %v629, %v1394
    %v1396 = vpop.f32.mrb[0].mxu0
    %v1397 = vadd.f32 %v633, %v1396
    %v1398 = vpop.f32.mrb[0].mxu0
    %v1399 = vpop.f32.mrb[0].mxu0
    %1400 = vdwg.mxu0
    %1401 = vmatprep.subr.bf16.mxu0 %v1089
    %1402 = vmatpush1.bf16.msra.mxu0 %v1088
    %1403 = vmatprep.subr.bf16.mxu0 %v1093
    %1404 = vmatpush1.bf16.msra.mxu0 %v1092
    %1405 = vmatprep.subr.bf16.mxu0 %v1097
    %1406 = vmatpush1.bf16.msra.mxu0 %v1096
    %1407 = vmatprep.subr.bf16.mxu0 %v1101
    %1408 = vmatpush1.bf16.msra.mxu0 %v1100
    %1409 = vmatprep.subr.bf16.mxu0 %v1105
    %1410 = vmatpush1.bf16.msra.mxu0 %v1104
    %1411 = vmatprep.subr.bf16.mxu0 %v1109
    %1412 = vmatpush1.bf16.msra.mxu0 %v1108
    %1413 = vmatprep.subr.bf16.mxu0 %v1113
    %1414 = vmatpush1.bf16.msra.mxu0 %v1112
    %1415 = vmatprep.subr.bf16.mxu0 %v1117
    %1416 = vmatpush1.bf16.msra.mxu0 %v1116
    %1417 = vmatprep.subr.bf16.mxu0 %v1121
    %1418 = vmatpush1.bf16.msra.mxu0 %v1120
    %1419 = vmatprep.subr.bf16.mxu0 %v1125
    %1420 = vmatpush1.bf16.msra.mxu0 %v1124
    %1421 = vmatprep.subr.bf16.mxu0 %v1129
    %1422 = vmatpush1.bf16.msra.mxu0 %v1128
    %1423 = vmatprep.subr.bf16.mxu0 %v1133
    %1424 = vmatpush1.bf16.msra.mxu0 %v1132
    %1425 = vmatprep.subr.bf16.mxu0 %v1137
    %1426 = vmatpush1.bf16.msra.mxu0 %v1136
    %1427 = vmatprep.subr.bf16.mxu0 %v1141
    %1428 = vmatpush1.bf16.msra.mxu0 %v1140
    %1429 = vmatprep.subr.bf16.mxu0 %v1145
    %1430 = vmatpush1.bf16.msra.mxu0 %v1144
    %1431 = vmatprep.subr.bf16.mxu0 %v1149
    %1432 = vmatpush1.bf16.msra.mxu0 %v1148
    %1433 = vmatprep.mubr.bf16.mxu0 %v616
    %1434 = vmatmul.mubr.bf16.gmra.mrb[0].mxu0 %v615
    %v1435 = vpop.f32.mrb[0].mxu0
    %v1436 = vadd.f32 %v1395, %v1435
    %v1437 = vpop.f32.mrb[0].mxu0
    %v1438 = vadd.f32 %v1397, %v1437
    %v1439 = vpop.f32.mrb[0].mxu0
    %v1440 = vpop.f32.mrb[0].mxu0
    %1441 = vdwg.mxu0
    %v1442 = vsel %vm455, %v1354, 0.0
    %v1443 = vsel %vm455, %v1356, 0.0
    %v1444 = vadd.f32 %v1442, %v1443
    %v1445 = vsel %vm455, %v1436, 0.0
    %v1446 = vadd.f32 %v1444, %v1445
    %v1447 = vsel %vm455, %v1438, 0.0
    %v1448 = vadd.f32 %v1446, %v1447
    %1449 = vadd.xlane.f32.xlu0 %v1448
    %v1450 = vpop.xlane.xlu0 %1449
    %v1451 = vmul.f32 %v1354, %v1354
    %v1452 = vmul.f32 %v1356, %v1356
    %v1453 = vmul.f32 %v1436, %v1436
    %v1454 = vmul.f32 %v1438, %v1438
    %v1455 = vsel %vm455, %v1451, 0.0
    %v1456 = vsel %vm455, %v1452, 0.0
    %v1457 = vadd.f32 %v1455, %v1456
    %v1458 = vsel %vm455, %v1453, 0.0
    %v1459 = vadd.f32 %v1457, %v1458
    %v1460 = vsel %vm455, %v1454, 0.0
    %v1461 = vadd.f32 %v1459, %v1460
    %1462 = vadd.xlane.f32.xlu0 %v1461
    %v1463 = vpop.xlane.xlu0 %1462
    %v1464 = vmul.f32 %v1450, 0.001953125
    %v1465 = vmul.f32 %v1463, 0.001953125
    %v1466 = vmul.f32 %v1464, %v1464
    %v1467 = vsub.f32 %v1465, %v1466
    %v1468 = vmax.f32 %v1467, 0.0
    %v1469 = vadd.f32 %v1468, 1e-05
    %v1470 = vrsqrt.pop %v1469
    %v1471 = vpack.c.bf16 %v1354, %v1354
    %v1472 = vpack.c.bf16 %v1356, %v1356
    %v1473 = vpack.c.bf16 %v1436, %v1436
    %v1474 = vpack.c.bf16 %v1438, %v1438
    %v1475 = vpack.c.bf16 %v1464, %v1464
    %v1476 = vsub.bf16 %v1471, %v1475
    %v1477 = vsub.bf16 %v1472, %v1475
    %v1478 = vsub.bf16 %v1473, %v1475
    %v1479 = vsub.bf16 %v1474, %v1475
    %v1480 = vpack.c.bf16 %v1470, %v1470
    %v1481 = vmul.bf16 %v1476, %v1480
    %v1482 = vmul.bf16 %v1477, %v1480
    %v1483 = vmul.bf16 %v1478, %v1480
    %v1484 = vmul.bf16 %v1479, %v1480
    %v1486 = vlaneseq
    %v1487 = vshrl.u32 %v1486, 7
    %v1488 = vsub.s32 0, %v1487
    %v1489 = vrot.slane %v296, %v1488
    %v1490 = vlaneseq
    %v1491 = vshrl.u32 %v1490, 7
    %v1492 = vsub.s32 1, %v1491
    %v1493 = vrot.slane %v296, %v1492
    %v1494 = vlaneseq
    %v1495 = vshrl.u32 %v1494, 7
    %v1496 = vsub.s32 2, %v1495
    %v1497 = vrot.slane %v296, %v1496
    %v1498 = vlaneseq
    %v1499 = vshrl.u32 %v1498, 7
    %v1500 = vsub.s32 3, %v1499
    %v1501 = vrot.slane %v296, %v1500
    %v1506 = vpack.c.bf16 %v1489, %v1489
    %v1507 = vpack.c.bf16 %v1493, %v1493
    %v1508 = vpack.c.bf16 %v1497, %v1497
    %v1509 = vpack.c.bf16 %v1501, %v1501
    %v1511 = vpack.i.b16 %v1506, %v1506
    %v1513 = vlaneseq
    %v1514 = vshrl.u32 %v1513, 7
    %v1515 = vsub.s32 0, %v1514
    %v1516 = vrot.slane %v1511, %v1515
    %v1518 = vpack.i.b16 %v1507, %v1507
    %v1520 = vlaneseq
    %v1521 = vshrl.u32 %v1520, 7
    %v1522 = vsub.s32 0, %v1521
    %v1523 = vrot.slane %v1518, %v1522
    %v1525 = vpack.i.b16 %v1508, %v1508
    %v1527 = vlaneseq
    %v1528 = vshrl.u32 %v1527, 7
    %v1529 = vsub.s32 0, %v1528
    %v1530 = vrot.slane %v1525, %v1529
    %v1532 = vpack.i.b16 %v1509, %v1509
    %v1534 = vlaneseq
    %v1535 = vshrl.u32 %v1534, 7
    %v1536 = vsub.s32 0, %v1535
    %v1537 = vrot.slane %v1532, %v1536
    %v1538 = vmul.bf16 %v1481, %v1516
    %v1539 = vmul.bf16 %v1482, %v1523
    %v1540 = vmul.bf16 %v1483, %v1530
    %v1541 = vmul.bf16 %v1484, %v1537
    %v1543 = vlaneseq
    %v1544 = vshrl.u32 %v1543, 7
    %v1545 = vsub.s32 0, %v1544
    %v1546 = vrot.slane %v298, %v1545
    %v1547 = vlaneseq
    %v1548 = vshrl.u32 %v1547, 7
    %v1549 = vsub.s32 1, %v1548
    %v1550 = vrot.slane %v298, %v1549
    %v1551 = vlaneseq
    %v1552 = vshrl.u32 %v1551, 7
    %v1553 = vsub.s32 2, %v1552
    %v1554 = vrot.slane %v298, %v1553
    %v1555 = vlaneseq
    %v1556 = vshrl.u32 %v1555, 7
    %v1557 = vsub.s32 3, %v1556
    %v1558 = vrot.slane %v298, %v1557
    %v1563 = vpack.c.bf16 %v1546, %v1546
    %v1564 = vpack.c.bf16 %v1550, %v1550
    %v1565 = vpack.c.bf16 %v1554, %v1554
    %v1566 = vpack.c.bf16 %v1558, %v1558
    %v1568 = vpack.i.b16 %v1563, %v1563
    %v1570 = vlaneseq
    %v1571 = vshrl.u32 %v1570, 7
    %v1572 = vsub.s32 0, %v1571
    %v1573 = vrot.slane %v1568, %v1572
    %v1575 = vpack.i.b16 %v1564, %v1564
    %v1577 = vlaneseq
    %v1578 = vshrl.u32 %v1577, 7
    %v1579 = vsub.s32 0, %v1578
    %v1580 = vrot.slane %v1575, %v1579
    %v1582 = vpack.i.b16 %v1565, %v1565
    %v1584 = vlaneseq
    %v1585 = vshrl.u32 %v1584, 7
    %v1586 = vsub.s32 0, %v1585
    %v1587 = vrot.slane %v1582, %v1586
    %v1589 = vpack.i.b16 %v1566, %v1566
    %v1591 = vlaneseq
    %v1592 = vshrl.u32 %v1591, 7
    %v1593 = vsub.s32 0, %v1592
    %v1594 = vrot.slane %v1589, %v1593
    %v1595 = vadd.bf16 %v1538, %v1573
    %v1596 = vadd.bf16 %v1539, %v1580
    %v1597 = vadd.bf16 %v1540, %v1587
    %v1598 = vadd.bf16 %v1541, %v1594
    %v1599 = vmax.bf16 %v1595, 0
    %v1600 = vmax.bf16 %v1596, 0
    %v1601 = vmax.bf16 %v1597, 0
    %v1602 = vmax.bf16 %v1598, 0
    %v1604 = vlaneseq
    %v1605 = vshrl.u32 %v1604, 7
    %v1606 = vsub.s32 0, %v1605
    %v1607 = vrot.slane %v299, %v1606
    %v1608 = vlaneseq
    %v1609 = vshrl.u32 %v1608, 7
    %v1610 = vsub.s32 1, %v1609
    %v1611 = vrot.slane %v299, %v1610
    %v1678 = vunpack.c.l.b16 %v224
    %v1679 = vunpack.c.h.b16 %v224
    %v1680 = vunpack.c.l.b16 %v225
    %v1681 = vunpack.c.h.b16 %v225
    %v1682 = vunpack.c.l.b16 %v226
    %v1683 = vunpack.c.h.b16 %v226
    %v1684 = vunpack.c.l.b16 %v227
    %v1685 = vunpack.c.h.b16 %v227
    %v1686 = vunpack.c.l.b16 %v228
    %v1687 = vunpack.c.h.b16 %v228
    %v1688 = vunpack.c.l.b16 %v229
    %v1689 = vunpack.c.h.b16 %v229
    %v1690 = vunpack.c.l.b16 %v230
    %v1691 = vunpack.c.h.b16 %v230
    %v1692 = vunpack.c.l.b16 %v231
    %v1693 = vunpack.c.h.b16 %v231
    %v1694 = vunpack.c.l.b16 %v232
    %v1695 = vunpack.c.h.b16 %v232
    %v1696 = vunpack.c.l.b16 %v233
    %v1697 = vunpack.c.h.b16 %v233
    %v1698 = vunpack.c.l.b16 %v234
    %v1699 = vunpack.c.h.b16 %v234
    %v1700 = vunpack.c.l.b16 %v235
    %v1701 = vunpack.c.h.b16 %v235
    %v1702 = vunpack.c.l.b16 %v236
    %v1703 = vunpack.c.h.b16 %v236
    %v1704 = vunpack.c.l.b16 %v237
    %v1705 = vunpack.c.h.b16 %v237
    %v1706 = vunpack.c.l.b16 %v238
    %v1707 = vunpack.c.h.b16 %v238
    %v1708 = vunpack.c.l.b16 %v239
    %v1709 = vunpack.c.h.b16 %v239
    %v1710 = vunpack.c.l.b16 %v240
    %v1711 = vunpack.c.h.b16 %v240
    %v1712 = vunpack.c.l.b16 %v241
    %v1713 = vunpack.c.h.b16 %v241
    %v1714 = vunpack.c.l.b16 %v242
    %v1715 = vunpack.c.h.b16 %v242
    %v1716 = vunpack.c.l.b16 %v243
    %v1717 = vunpack.c.h.b16 %v243
    %v1718 = vunpack.c.l.b16 %v244
    %v1719 = vunpack.c.h.b16 %v244
    %v1720 = vunpack.c.l.b16 %v245
    %v1721 = vunpack.c.h.b16 %v245
    %v1722 = vunpack.c.l.b16 %v246
    %v1723 = vunpack.c.h.b16 %v246
    %v1724 = vunpack.c.l.b16 %v247
    %v1725 = vunpack.c.h.b16 %v247
    %v1726 = vunpack.c.l.b16 %v248
    %v1727 = vunpack.c.h.b16 %v248
    %v1728 = vunpack.c.l.b16 %v249
    %v1729 = vunpack.c.h.b16 %v249
    %v1730 = vunpack.c.l.b16 %v250
    %v1731 = vunpack.c.h.b16 %v250
    %v1732 = vunpack.c.l.b16 %v251
    %v1733 = vunpack.c.h.b16 %v251
    %v1734 = vunpack.c.l.b16 %v252
    %v1735 = vunpack.c.h.b16 %v252
    %v1736 = vunpack.c.l.b16 %v253
    %v1737 = vunpack.c.h.b16 %v253
    %v1738 = vunpack.c.l.b16 %v254
    %v1739 = vunpack.c.h.b16 %v254
    %v1740 = vunpack.c.l.b16 %v255
    %v1741 = vunpack.c.h.b16 %v255
    %v1742 = vunpack.c.l.b16 %v256
    %v1743 = vunpack.c.h.b16 %v256
    %v1744 = vunpack.c.l.b16 %v257
    %v1745 = vunpack.c.h.b16 %v257
    %v1746 = vunpack.c.l.b16 %v258
    %v1747 = vunpack.c.h.b16 %v258
    %v1748 = vunpack.c.l.b16 %v259
    %v1749 = vunpack.c.h.b16 %v259
    %v1750 = vunpack.c.l.b16 %v260
    %v1751 = vunpack.c.h.b16 %v260
    %v1752 = vunpack.c.l.b16 %v261
    %v1753 = vunpack.c.h.b16 %v261
    %v1754 = vunpack.c.l.b16 %v262
    %v1755 = vunpack.c.h.b16 %v262
    %v1756 = vunpack.c.l.b16 %v263
    %v1757 = vunpack.c.h.b16 %v263
    %v1758 = vunpack.c.l.b16 %v264
    %v1759 = vunpack.c.h.b16 %v264
    %v1760 = vunpack.c.l.b16 %v265
    %v1761 = vunpack.c.h.b16 %v265
    %v1762 = vunpack.c.l.b16 %v266
    %v1763 = vunpack.c.h.b16 %v266
    %v1764 = vunpack.c.l.b16 %v267
    %v1765 = vunpack.c.h.b16 %v267
    %v1766 = vunpack.c.l.b16 %v268
    %v1767 = vunpack.c.h.b16 %v268
    %v1768 = vunpack.c.l.b16 %v269
    %v1769 = vunpack.c.h.b16 %v269
    %v1770 = vunpack.c.l.b16 %v270
    %v1771 = vunpack.c.h.b16 %v270
    %v1772 = vunpack.c.l.b16 %v271
    %v1773 = vunpack.c.h.b16 %v271
    %v1774 = vunpack.c.l.b16 %v272
    %v1775 = vunpack.c.h.b16 %v272
    %v1776 = vunpack.c.l.b16 %v273
    %v1777 = vunpack.c.h.b16 %v273
    %v1778 = vunpack.c.l.b16 %v274
    %v1779 = vunpack.c.h.b16 %v274
    %v1780 = vunpack.c.l.b16 %v275
    %v1781 = vunpack.c.h.b16 %v275
    %v1782 = vunpack.c.l.b16 %v276
    %v1783 = vunpack.c.h.b16 %v276
    %v1784 = vunpack.c.l.b16 %v277
    %v1785 = vunpack.c.h.b16 %v277
    %v1786 = vunpack.c.l.b16 %v278
    %v1787 = vunpack.c.h.b16 %v278
    %v1788 = vunpack.c.l.b16 %v279
    %v1789 = vunpack.c.h.b16 %v279
    %v1790 = vunpack.c.l.b16 %v280
    %v1791 = vunpack.c.h.b16 %v280
    %v1792 = vunpack.c.l.b16 %v281
    %v1793 = vunpack.c.h.b16 %v281
    %v1794 = vunpack.c.l.b16 %v282
    %v1795 = vunpack.c.h.b16 %v282
    %v1796 = vunpack.c.l.b16 %v283
    %v1797 = vunpack.c.h.b16 %v283
    %v1798 = vunpack.c.l.b16 %v284
    %v1799 = vunpack.c.h.b16 %v284
    %v1800 = vunpack.c.l.b16 %v285
    %v1801 = vunpack.c.h.b16 %v285
    %v1802 = vunpack.c.l.b16 %v286
    %v1803 = vunpack.c.h.b16 %v286
    %v1804 = vunpack.c.l.b16 %v287
    %v1805 = vunpack.c.h.b16 %v287
    %v1806 = vpack.c.b16 %v1680, %v1678
    %v1807 = vpack.c.b16 %v1681, %v1679
    %v1808 = vpack.c.b16 %v1684, %v1682
    %v1809 = vpack.c.b16 %v1685, %v1683
    %v1810 = vpack.c.b16 %v1688, %v1686
    %v1811 = vpack.c.b16 %v1689, %v1687
    %v1812 = vpack.c.b16 %v1692, %v1690
    %v1813 = vpack.c.b16 %v1693, %v1691
    %v1814 = vpack.c.b16 %v1696, %v1694
    %v1815 = vpack.c.b16 %v1697, %v1695
    %v1816 = vpack.c.b16 %v1700, %v1698
    %v1817 = vpack.c.b16 %v1701, %v1699
    %v1818 = vpack.c.b16 %v1704, %v1702
    %v1819 = vpack.c.b16 %v1705, %v1703
    %v1820 = vpack.c.b16 %v1708, %v1706
    %v1821 = vpack.c.b16 %v1709, %v1707
    %v1822 = vpack.c.b16 %v1712, %v1710
    %v1823 = vpack.c.b16 %v1713, %v1711
    %v1824 = vpack.c.b16 %v1716, %v1714
    %v1825 = vpack.c.b16 %v1717, %v1715
    %v1826 = vpack.c.b16 %v1720, %v1718
    %v1827 = vpack.c.b16 %v1721, %v1719
    %v1828 = vpack.c.b16 %v1724, %v1722
    %v1829 = vpack.c.b16 %v1725, %v1723
    %v1830 = vpack.c.b16 %v1728, %v1726
    %v1831 = vpack.c.b16 %v1729, %v1727
    %v1832 = vpack.c.b16 %v1732, %v1730
    %v1833 = vpack.c.b16 %v1733, %v1731
    %v1834 = vpack.c.b16 %v1736, %v1734
    %v1835 = vpack.c.b16 %v1737, %v1735
    %v1836 = vpack.c.b16 %v1740, %v1738
    %v1837 = vpack.c.b16 %v1741, %v1739
    %v1838 = vpack.c.b16 %v1744, %v1742
    %v1839 = vpack.c.b16 %v1745, %v1743
    %v1840 = vpack.c.b16 %v1748, %v1746
    %v1841 = vpack.c.b16 %v1749, %v1747
    %v1842 = vpack.c.b16 %v1752, %v1750
    %v1843 = vpack.c.b16 %v1753, %v1751
    %v1844 = vpack.c.b16 %v1756, %v1754
    %v1845 = vpack.c.b16 %v1757, %v1755
    %v1846 = vpack.c.b16 %v1760, %v1758
    %v1847 = vpack.c.b16 %v1761, %v1759
    %v1848 = vpack.c.b16 %v1764, %v1762
    %v1849 = vpack.c.b16 %v1765, %v1763
    %v1850 = vpack.c.b16 %v1768, %v1766
    %v1851 = vpack.c.b16 %v1769, %v1767
    %v1852 = vpack.c.b16 %v1772, %v1770
    %v1853 = vpack.c.b16 %v1773, %v1771
    %v1854 = vpack.c.b16 %v1776, %v1774
    %v1855 = vpack.c.b16 %v1777, %v1775
    %v1856 = vpack.c.b16 %v1780, %v1778
    %v1857 = vpack.c.b16 %v1781, %v1779
    %v1858 = vpack.c.b16 %v1784, %v1782
    %v1859 = vpack.c.b16 %v1785, %v1783
    %v1860 = vpack.c.b16 %v1788, %v1786
    %v1861 = vpack.c.b16 %v1789, %v1787
    %v1862 = vpack.c.b16 %v1792, %v1790
    %v1863 = vpack.c.b16 %v1793, %v1791
    %v1864 = vpack.c.b16 %v1796, %v1794
    %v1865 = vpack.c.b16 %v1797, %v1795
    %v1866 = vpack.c.b16 %v1800, %v1798
    %v1867 = vpack.c.b16 %v1801, %v1799
    %v1868 = vpack.c.b16 %v1804, %v1802
    %v1869 = vpack.c.b16 %v1805, %v1803
    %1934 = vmatprep.subr.bf16.mxu0 %v1807
    %1935 = vmatpush1.bf16.msra.mxu0 %v1806
    %1936 = vmatprep.subr.bf16.mxu0 %v1809
    %1937 = vmatpush1.bf16.msra.mxu0 %v1808
    %1938 = vmatprep.subr.bf16.mxu0 %v1811
    %1939 = vmatpush1.bf16.msra.mxu0 %v1810
    %1940 = vmatprep.subr.bf16.mxu0 %v1813
    %1941 = vmatpush1.bf16.msra.mxu0 %v1812
    %1942 = vmatprep.subr.bf16.mxu0 %v1815
    %1943 = vmatpush1.bf16.msra.mxu0 %v1814
    %1944 = vmatprep.subr.bf16.mxu0 %v1817
    %1945 = vmatpush1.bf16.msra.mxu0 %v1816
    %1946 = vmatprep.subr.bf16.mxu0 %v1819
    %1947 = vmatpush1.bf16.msra.mxu0 %v1818
    %1948 = vmatprep.subr.bf16.mxu0 %v1821
    %1949 = vmatpush1.bf16.msra.mxu0 %v1820
    %1950 = vmatprep.subr.bf16.mxu0 %v1823
    %1951 = vmatpush1.bf16.msra.mxu0 %v1822
    %1952 = vmatprep.subr.bf16.mxu0 %v1825
    %1953 = vmatpush1.bf16.msra.mxu0 %v1824
    %1954 = vmatprep.subr.bf16.mxu0 %v1827
    %1955 = vmatpush1.bf16.msra.mxu0 %v1826
    %1956 = vmatprep.subr.bf16.mxu0 %v1829
    %1957 = vmatpush1.bf16.msra.mxu0 %v1828
    %1958 = vmatprep.subr.bf16.mxu0 %v1831
    %1959 = vmatpush1.bf16.msra.mxu0 %v1830
    %1960 = vmatprep.subr.bf16.mxu0 %v1833
    %1961 = vmatpush1.bf16.msra.mxu0 %v1832
    %1962 = vmatprep.subr.bf16.mxu0 %v1835
    %1963 = vmatpush1.bf16.msra.mxu0 %v1834
    %1964 = vmatprep.subr.bf16.mxu0 %v1837
    %1965 = vmatpush1.bf16.msra.mxu0 %v1836
    %1966 = vmatprep.mubr.bf16.mxu0 %v1600
    %1967 = vmatmul.mubr.bf16.gmra.mrb[0].mxu0 %v1599
    %v1968 = vpop.f32.mrb[0].mxu0
    %v1969 = vadd.f32 %v1607, %v1968
    %v1970 = vpop.f32.mrb[0].mxu0
    %v1971 = vadd.f32 %v1611, %v1970
    %v1972 = vpop.f32.mrb[0].mxu0
    %v1973 = vpop.f32.mrb[0].mxu0
    %1974 = vdwg.mxu0
    %1975 = vmatprep.subr.bf16.mxu0 %v1839
    %1976 = vmatpush1.bf16.msra.mxu0 %v1838
    %1977 = vmatprep.subr.bf16.mxu0 %v1841
    %1978 = vmatpush1.bf16.msra.mxu0 %v1840
    %1979 = vmatprep.subr.bf16.mxu0 %v1843
    %1980 = vmatpush1.bf16.msra.mxu0 %v1842
    %1981 = vmatprep.subr.bf16.mxu0 %v1845
    %1982 = vmatpush1.bf16.msra.mxu0 %v1844
    %1983 = vmatprep.subr.bf16.mxu0 %v1847
    %1984 = vmatpush1.bf16.msra.mxu0 %v1846
    %1985 = vmatprep.subr.bf16.mxu0 %v1849
    %1986 = vmatpush1.bf16.msra.mxu0 %v1848
    %1987 = vmatprep.subr.bf16.mxu0 %v1851
    %1988 = vmatpush1.bf16.msra.mxu0 %v1850
    %1989 = vmatprep.subr.bf16.mxu0 %v1853
    %1990 = vmatpush1.bf16.msra.mxu0 %v1852
    %1991 = vmatprep.subr.bf16.mxu0 %v1855
    %1992 = vmatpush1.bf16.msra.mxu0 %v1854
    %1993 = vmatprep.subr.bf16.mxu0 %v1857
    %1994 = vmatpush1.bf16.msra.mxu0 %v1856
    %1995 = vmatprep.subr.bf16.mxu0 %v1859
    %1996 = vmatpush1.bf16.msra.mxu0 %v1858
    %1997 = vmatprep.subr.bf16.mxu0 %v1861
    %1998 = vmatpush1.bf16.msra.mxu0 %v1860
    %1999 = vmatprep.subr.bf16.mxu0 %v1863
    %2000 = vmatpush1.bf16.msra.mxu0 %v1862
    %2001 = vmatprep.subr.bf16.mxu0 %v1865
    %2002 = vmatpush1.bf16.msra.mxu0 %v1864
    %2003 = vmatprep.subr.bf16.mxu0 %v1867
    %2004 = vmatpush1.bf16.msra.mxu0 %v1866
    %2005 = vmatprep.subr.bf16.mxu0 %v1869
    %2006 = vmatpush1.bf16.msra.mxu0 %v1868
    %2007 = vmatprep.mubr.bf16.mxu0 %v1602
    %2008 = vmatmul.mubr.bf16.gmra.mrb[0].mxu0 %v1601
    %v2009 = vpop.f32.mrb[0].mxu0
    %v2010 = vadd.f32 %v1969, %v2009
    %v2011 = vpop.f32.mrb[0].mxu0
    %v2012 = vadd.f32 %v1971, %v2011
    %v2013 = vpop.f32.mrb[0].mxu0
    %v2014 = vpop.f32.mrb[0].mxu0
    %2015 = vdwg.mxu0
    %v2016 = vsel %vm455, %v2010, 0.0
    %v2017 = vsel %vm455, %v2012, 0.0
    %v2018 = vadd.f32 %v2016, %v2017
    %2019 = vadd.xlane.f32.xlu0 %v2018
    %v2020 = vpop.xlane.xlu0 %2019
    %v2021 = vmul.f32 %v2010, %v2010
    %v2022 = vmul.f32 %v2012, %v2012
    %v2023 = vsel %vm455, %v2021, 0.0
    %v2024 = vsel %vm455, %v2022, 0.0
    %v2025 = vadd.f32 %v2023, %v2024
    %2026 = vadd.xlane.f32.xlu0 %v2025
    %v2027 = vpop.xlane.xlu0 %2026
    %v2028 = vmul.f32 %v2020, 0.00390625
    %v2029 = vmul.f32 %v2027, 0.00390625
    %v2030 = vmul.f32 %v2028, %v2028
    %v2031 = vsub.f32 %v2029, %v2030
    %v2032 = vmax.f32 %v2031, 0.0
    %v2033 = vadd.f32 %v2032, 1e-05
    %v2034 = vrsqrt.pop %v2033
    %v2035 = vpack.c.bf16 %v2010, %v2010
    %v2036 = vpack.c.bf16 %v2012, %v2012
    %v2037 = vpack.c.bf16 %v2028, %v2028
    %v2038 = vsub.bf16 %v2035, %v2037
    %v2039 = vsub.bf16 %v2036, %v2037
    %v2040 = vpack.c.bf16 %v2034, %v2034
    %v2041 = vmul.bf16 %v2038, %v2040
    %v2042 = vmul.bf16 %v2039, %v2040
    %v2044 = vlaneseq
    %v2045 = vshrl.u32 %v2044, 7
    %v2046 = vsub.s32 0, %v2045
    %v2047 = vrot.slane %v301, %v2046
    %v2048 = vlaneseq
    %v2049 = vshrl.u32 %v2048, 7
    %v2050 = vsub.s32 1, %v2049
    %v2051 = vrot.slane %v301, %v2050
    %v2054 = vpack.c.bf16 %v2047, %v2047
    %v2055 = vpack.c.bf16 %v2051, %v2051
    %v2057 = vpack.i.b16 %v2054, %v2054
    %v2059 = vlaneseq
    %v2060 = vshrl.u32 %v2059, 7
    %v2061 = vsub.s32 0, %v2060
    %v2062 = vrot.slane %v2057, %v2061
    %v2064 = vpack.i.b16 %v2055, %v2055
    %v2066 = vlaneseq
    %v2067 = vshrl.u32 %v2066, 7
    %v2068 = vsub.s32 0, %v2067
    %v2069 = vrot.slane %v2064, %v2068
    %v2070 = vmul.bf16 %v2041, %v2062
    %v2071 = vmul.bf16 %v2042, %v2069
    %v2073 = vlaneseq
    %v2074 = vshrl.u32 %v2073, 7
    %v2075 = vsub.s32 0, %v2074
    %v2076 = vrot.slane %v303, %v2075
    %v2077 = vlaneseq
    %v2078 = vshrl.u32 %v2077, 7
    %v2079 = vsub.s32 1, %v2078
    %v2080 = vrot.slane %v303, %v2079
    %v2083 = vpack.c.bf16 %v2076, %v2076
    %v2084 = vpack.c.bf16 %v2080, %v2080
    %v2086 = vpack.i.b16 %v2083, %v2083
    %v2088 = vlaneseq
    %v2089 = vshrl.u32 %v2088, 7
    %v2090 = vsub.s32 0, %v2089
    %v2091 = vrot.slane %v2086, %v2090
    %v2093 = vpack.i.b16 %v2084, %v2084
    %v2095 = vlaneseq
    %v2096 = vshrl.u32 %v2095, 7
    %v2097 = vsub.s32 0, %v2096
    %v2098 = vrot.slane %v2093, %v2097
    %v2099 = vadd.bf16 %v2070, %v2091
    %v2100 = vadd.bf16 %v2071, %v2098
    %v2101 = vmax.bf16 %v2099, 0
    %v2102 = vmax.bf16 %v2100, 0
    %v2103 = vunpack.c.l.bf16 %v2101
    %v2104 = vunpack.c.l.bf16 %v2102
    %v2106 = vlaneseq
    %v2107 = vshrl.u32 %v2106, 7
    %v2108 = vsub.s32 0, %v2107
    %v2109 = vrot.slane %v305, %v2108
    %v2110 = vlaneseq
    %v2111 = vshrl.u32 %v2110, 7
    %v2112 = vsub.s32 1, %v2111
    %v2113 = vrot.slane %v305, %v2112
    %v2116 = vmul.f32 %v2103, %v2109
    %v2117 = vmul.f32 %v2104, %v2113
    %v2118 = vsel %vm455, %v2116, 0.0
    %v2119 = vsel %vm455, %v2117, 0.0
    %v2120 = vadd.f32 %v2118, %v2119
    %2121 = vadd.xlane.f32.xlu0 %v2120
    %v2122 = vpop.xlane.xlu0 %2121
    %v2123 = vadd.f32 %v2122, %v306
    %vm2124 = vcmask 1024
    %2125 = vst.msk [vmem:[%s6] sm:$0x3] %vm2124, %v2123
    // Predicated region
    $region46: #{tpu_custom_call.1} parent=1 // pred_check
      _
    $region47: #{tpu_custom_call.1} parent=1 // pred_check_branch
      %2127 = sbr.rel (0) target = $region49
    $region48: #{tpu_custom_call.1} parent=1 // pred_region
      _
    $region49: #{tpu_custom_call.1} parent=1 // pred_fallthru
      _
    // Predicated region
    $region50: #{tpu_custom_call.1} parent=1 // pred_check
      _
    $region51: #{tpu_custom_call.1} parent=1 // pred_check_branch
      %2129 = sbr.rel (0) target = $region53
    $region52: #{tpu_custom_call.1} parent=1 // pred_region
      _
    $region53: #{tpu_custom_call.1} parent=1 // pred_fallthru
      _
    %2130 = vsyncpa [#allocation3], 1
    %2131 = vsyncpa [#allocation5], 1
    %2132 = vsyncpa [#allocation8], 1

</llo_original>
